<compile_context>
chip_gen: v5e
topology: v5e:2x2
jax: 0.10.0
libtpu: 0.0.40
codegen_flags: <defaults>
</compile_context>

<pallas_src>
import functools
import math

import jax
import jax.numpy as jnp
from jax import lax
from jax.experimental import pallas as pl
from jax.experimental.pallas import tpu as pltpu


# ----------------------------------------------------------------------------
# Pallas kernels
# ----------------------------------------------------------------------------

def _precompute_kernel(x_ref, w_ref, o_ref):
    # Single fused (rows, D) @ (D, 3D) MXU pass for key / value / glimpse-key.
    o_ref[...] = jnp.dot(x_ref[...], w_ref[...],
                         preferred_element_type=jnp.float32)


def am_decoder_precompute(graph_embed, Wk, Wv, Wg):
    """AM_Decoder_Precompute.compute: fused [Wk|Wv|Wg] projection of graph_embed."""
    B, N, D = graph_embed.shape
    W = jnp.concatenate([Wk, Wv, Wg], axis=1)                 # (D, 3D)
    x = graph_embed.reshape(B * N, D).astype(jnp.float32)
    M = B * N
    G = 2 if M >= 16 else 1                                   # >=2 blocks (v7x 2 TCs)
    tm = ((-(-M // G)) + 7) // 8 * 8
    Mp = tm * G
    if Mp > M:
        x = jnp.concatenate([x, jnp.zeros((Mp - M, D), jnp.float32)], axis=0)
    out = pl.pallas_call(
        _precompute_kernel,
        out_shape=jax.ShapeDtypeStruct((Mp, 3 * D), jnp.float32),
        grid=(G,),
        in_specs=[pl.BlockSpec((tm, D), lambda i: (i, 0)),
                  pl.BlockSpec((D, 3 * D), lambda i: (0, 0))],
        out_specs=pl.BlockSpec((tm, 3 * D), lambda i: (i, 0)),
        compiler_params=pltpu.CompilerParams(dimension_semantics=("parallel",)),
    )(x, W)
    out = out[:M].reshape(B, N, 3 * D)
    return out[..., :D], out[..., D:2 * D], out[..., 2 * D:]


def _decoder_step_kernel(ctx_ref, wq_ref, wo_ref, kt_ref, vh_ref, kgt_ref,
                         mask_ref, logits_ref, hcat_ref, *, n_heads, hidden_dim):
    """One decoder step for a (TB, V) block of (batch, vehicle) contexts.

    first_MHA (masked multi-head attention of the (V, 2D+2) context over the N
    node keys/values) with a single W_out matmul, followed by the single-head
    pointer score 10*tanh(glimpse @ K_g^T / sqrt(D)) masked with -1e30.
    """
    TB, V, C = ctx_ref.shape
    D = wq_ref.shape[1]
    neg = jnp.float32(-1e30)
    scale = jnp.float32(1.0 / math.sqrt(hidden_dim))
    inv_sqrt_d = jnp.float32(1.0 / math.sqrt(D))

    # Mask bias computed once (int8 mask: 1 == masked), reused for every head.
    maskf = mask_ref[...].astype(jnp.float32)                 # (TB, V, Np)
    bias = maskf * neg

    # W_query projection for all TB*V context rows in a single MXU pass.
    ctx2 = ctx_ref[...].reshape(TB * V, C)
    q = jnp.dot(ctx2, wq_ref[...], preferred_element_type=jnp.float32)
    q3 = q.reshape(TB, V, D)

    for b in range(TB):                                       # static unroll
        qb = q3[b]                                            # (V, D)
        for h in range(n_heads):
            lo = h * hidden_dim
            qh = qb[:, lo:lo + hidden_dim]                    # (V, dh)
            # K already stored head-major & transposed: (dh, Np)
            s = jnp.dot(qh, kt_ref[b, h],
                        preferred_element_type=jnp.float32) * scale   # (V, Np)
            s = s + bias[b]
            s = s - jnp.max(s, axis=-1, keepdims=True)
            p = jnp.exp(s)
            p = p * pl.reciprocal(jnp.sum(p, axis=-1, keepdims=True),
                                  approx=True)
            head = jnp.dot(p, vh_ref[b, h],
                           preferred_element_type=jnp.float32)        # (V, dh)
            # Assemble concat(heads) in VMEM scratch at its lane offset.
            hcat_ref[b, :, lo:lo + hidden_dim] = head

    # Single W_out projection (== concat(heads) @ W_out), all rows at once.
    heads_cat = hcat_ref[...].reshape(TB * V, D)
    glimpse = jnp.dot(heads_cat, wo_ref[...],
                      preferred_element_type=jnp.float32)             # (TB*V, D)
    g3 = glimpse.reshape(TB, V, D)

    # Second single-head attention, score only, tanh clipping C=10, masked.
    for b in range(TB):
        score = jnp.dot(g3[b], kgt_ref[b],
                        preferred_element_type=jnp.float32) * inv_sqrt_d  # (V, Np)
        logits = 10.0 * jnp.tanh(score)
        logits_ref[b] = jnp.where(maskf[b] > 0.5, neg, logits)


def decoder_step_logits(ctx_p, Wq, Wo, kt, vh, kgt, mask_i8, *, n_heads,
                        hidden_dim, block_batch):
    Bp, V, C = ctx_p.shape
    _, H, dh, Np = kt.shape
    D = Wq.shape[1]
    TB = block_batch
    G = Bp // TB
    kern = functools.partial(_decoder_step_kernel, n_heads=n_heads,
                             hidden_dim=hidden_dim)
    return pl.pallas_call(
        kern,
        out_shape=jax.ShapeDtypeStruct((Bp, V, Np), jnp.float32),
        grid=(G,),
        in_specs=[
            pl.BlockSpec((TB, V, C), lambda i: (i, 0, 0)),          # context
            pl.BlockSpec((C, D), lambda i: (0, 0)),                 # W_query
            pl.BlockSpec((D, D), lambda i: (0, 0)),                 # W_out
            pl.BlockSpec((TB, H, dh, Np), lambda i: (i, 0, 0, 0)),  # K^T per head
            pl.BlockSpec((TB, H, Np, dh), lambda i: (i, 0, 0, 0)),  # V per head
            pl.BlockSpec((TB, D, Np), lambda i: (i, 0, 0)),         # glimpse K^T
            pl.BlockSpec((TB, V, Np), lambda i: (i, 0, 0)),         # mask (int8)
        ],
        out_specs=pl.BlockSpec((TB, V, Np), lambda i: (i, 0, 0)),
        scratch_shapes=[pltpu.VMEM((TB, V, D), jnp.float32)],       # concat(heads)
        compiler_params=pltpu.CompilerParams(dimension_semantics=("parallel",)),
    )(ctx_p, Wq, Wo, kt, vh, kgt, mask_i8)


# ----------------------------------------------------------------------------
# Plain-JAX glue reproducing the PyTorch forward (device-side decode loop)
# ----------------------------------------------------------------------------

def prepare_mask(batch_size, problem_size, vehicle_num):
    selected_mask = jnp.zeros((batch_size, vehicle_num, problem_size), bool)
    selected_mask = selected_mask.at[:, :, 0].set(True)
    mask = selected_mask
    done_mask = jnp.ones((1, vehicle_num, problem_size), bool).at[0, 0, 0].set(False)
    return mask, selected_mask, done_mask


def _decode(params, problems, graph_embed, avg_graph_embed, rng, *,
            vehicle_num, decoder_type, unfinish_complete, will_re_tsp,
            n_heads_dec):
    B, N, _ = problems.shape
    D = graph_embed.shape[-1]
    V = vehicle_num
    H = n_heads_dec
    dh = D // H
    Np = ((N + 127) // 128) * 128          # lane-dense node axis (review item)
    G = 2 if B >= 2 else 1                 # >=2 grid blocks (v7x dual TensorCore)
    TB = -(-B // G)
    Bp = G * TB

    coords = problems[:, :, :2].astype(jnp.float32)
    demands = problems[:, :, 2].astype(jnp.float32)

    Wk = params["enc_key_proj"]
    Wv = params["enc_val_proj"]
    Wg = params["enc_key_for_glimpse_proj"]
    Wq = params["first_MHA_Wq"]
    Wo = params["first_MHA_Wo"]

    # --- precompute once; lay K/V out head-major, pre-transposed, padded ------
    pk, pv, pg = am_decoder_precompute(graph_embed, Wk, Wv, Wg)

    def pad_bn(x):
        return jnp.pad(x, ((0, Bp - B), (0, Np - N), (0, 0)))

    kt = jnp.transpose(pad_bn(pk).reshape(Bp, Np, H, dh), (0, 2, 3, 1))  # (Bp,H,dh,Np)
    vh = jnp.transpose(pad_bn(pv).reshape(Bp, Np, H, dh), (0, 2, 1, 3))  # (Bp,H,Np,dh)
    kgt = jnp.transpose(pad_bn(pg), (0, 2, 1))                           # (Bp,D,Np)

    avg_ge = jnp.broadcast_to(avg_graph_embed[:, None, :],
                              (B, V, D)).astype(jnp.float32)
    batch_arange = jnp.arange(B)
    depot_xy = coords[:, 0:1, :]

    it_max = N + V + 4
    t_max = 2 * it_max + 2

    mask0, selected_mask0, done_mask = prepare_mask(B, N, V)

    def node_xy(idx):                      # (B, V) int -> (B, V, 2)
        return jnp.take_along_axis(
            coords, jnp.broadcast_to(idx[:, :, None], (B, V, 2)), axis=1)

    dec_step = functools.partial(decoder_step_logits, n_heads=H,
                                 hidden_dim=dh, block_batch=TB)

    state = dict(
        rng=rng,
        actions=jnp.zeros((B, V, t_max), jnp.int32),   # column 0 == initial zeros
        ptr=jnp.array(1, jnp.int32),
        it=jnp.array(0, jnp.int32),
        log_prob_sum=jnp.zeros((B,), jnp.float32),
        assign_count=jnp.ones((B,), jnp.int32),
        remain_capacity=jnp.ones((B, V), jnp.float32),
        route_len=jnp.zeros((B, V), jnp.float32),
        max_from_depot=jnp.zeros((B, V), jnp.float32),
        dist_diff=jnp.zeros((B, V), jnp.float32),
        last_node=jnp.zeros((B, V), jnp.int32),
        selected_mask=selected_mask0,
        mask=mask0,
        unable_finish_flag=jnp.zeros((B,), bool),
        done_all=jnp.array(False),
    )

    def cond(s):
        return jnp.logical_not(s["done_all"]) & (s["it"] < it_max)

    def body(s):
        rng = s["rng"]
        mask = s["mask"]
        vehicle_mask = jnp.all(mask, axis=-1)                        # (B, V)

        cur_embed = jnp.take_along_axis(
            graph_embed,
            jnp.broadcast_to(s["last_node"][:, :, None], (B, V, D)), axis=1)
        # with_vehicle_encoder == False branch
        context = jnp.concatenate(
            (avg_ge, cur_embed, s["remain_capacity"][:, :, None],
             s["dist_diff"][:, :, None]), axis=2).astype(jnp.float32)

        ctx_p = jnp.pad(context, ((0, Bp - B), (0, 0), (0, 0)))
        mask_i8 = jnp.pad(mask, ((0, Bp - B), (0, 0), (0, Np - N)),
                          constant_values=True).astype(jnp.int8)
        logits = dec_step(ctx_p, Wq, Wo, kt, vh, kgt, mask_i8)[:B]   # (B, V, Np)

        # AM_Decoder.compute with cross_prob=True: joint (vehicle, customer) softmax
        logp = jax.nn.log_softmax(logits.reshape(B, V * Np), axis=-1)
        if decoder_type == "greedy":
            flat = jnp.argmax(logp, axis=-1).astype(jnp.int32)
        else:
            rng, sub = jax.random.split(rng)
            flat = jax.random.categorical(sub, logp, axis=-1).astype(jnp.int32)
        log_prob = jnp.take_along_axis(logp, flat[:, None], axis=1)[:, 0]
        vehicle_sel = flat // Np
        customer_sel = flat % Np

        prev_node = s["last_node"]
        current_customers = prev_node.at[batch_arange, vehicle_sel].set(customer_sel)

        # O(1) incremental route-length update (replaces full cal_distance).
        xy_prev = node_xy(prev_node)
        xy_new = node_xy(current_customers)
        route_len = s["route_len"] + jnp.sqrt(
            jnp.sum((xy_new - xy_prev) ** 2, axis=-1))
        max_from_depot = jnp.maximum(
            s["max_from_depot"],
            jnp.sqrt(jnp.sum((xy_new - depot_xy) ** 2, axis=-1)))

        actions = lax.dynamic_update_slice(
            s["actions"], current_customers[:, :, None], (0, 0, s["ptr"]))
        ptr = s["ptr"] + 1

        log_prob_step = log_prob
        if unfinish_complete:
            log_prob_step = jnp.where(s["unable_finish_flag"], 0.0, log_prob_step)
        log_prob_sum = s["log_prob_sum"] + log_prob_step

        assign_count = s["assign_count"] + (customer_sel != 0).astype(jnp.int32)
        done_all = jnp.all(assign_count == N)
        not_done = jnp.logical_not(done_all)

        # --- updates after the (traced) break check; gated where observable ---
        remain_capacity = s["remain_capacity"].at[batch_arange, vehicle_sel].add(
            -demands[batch_arange, customer_sel])
        selected_mask = s["selected_mask"].at[batch_arange, :, customer_sel].set(True)
        demand_or_visited = ((remain_capacity[:, :, None] + 1e-6
                              < demands[:, None, :]) | selected_mask)
        vehicle_encounter = (jnp.all(demand_or_visited, axis=2)
                             & (current_customers != 0))
        write_enc = jnp.any(vehicle_encounter) & not_done

        xy_cur = node_xy(current_customers)
        back_seg = jnp.where(
            vehicle_encounter,
            jnp.sqrt(jnp.sum((xy_cur - depot_xy) ** 2, axis=-1)), 0.0)
        route_len = route_len + back_seg
        current_customers = jnp.where(vehicle_encounter, 0, current_customers)
        remain_capacity = jnp.where(vehicle_encounter, 0.0, remain_capacity)
        vehicle_mask = vehicle_mask | vehicle_encounter
        # write extra (return-to-depot) column; only counts if it really happened
        actions = lax.dynamic_update_slice(
            actions, current_customers[:, :, None], (0, 0, ptr))
        ptr = ptr + write_enc.astype(jnp.int32)

        if not will_re_tsp:
            masked_distance = jnp.where(vehicle_mask, jnp.inf, route_len)
            dist_diff = route_len - jnp.min(masked_distance, axis=1, keepdims=True)
            dist_diff = jnp.where(vehicle_mask, 0.0, dist_diff)
        else:
            dist_diff = max_from_depot

        done = assign_count == N
        new_mask = jnp.where(done[:, None, None], done_mask,
                             selected_mask | demand_or_visited)
        unable_finish = (jnp.all(jnp.all(new_mask, -1), -1)
                         & jnp.logical_not(done))
        unable_finish_flag = s["unable_finish_flag"]
        if unfinish_complete:
            any_un = jnp.any(unable_finish)
            remain_capacity = jnp.where(unable_finish[:, None], 1.0, remain_capacity)
            unable_finish_flag = unable_finish_flag | unable_finish
            demand_too_large = remain_capacity[:, :, None] < demands[:, None, :]
            mask_alt = jnp.where(done[:, None, None], done_mask,
                                 selected_mask | demand_too_large)
            new_mask = jnp.where(any_un, mask_alt, new_mask)
        else:
            unable_finish_flag = unable_finish_flag | unable_finish
            assign_count = jnp.where(unable_finish, N, assign_count)
            new_mask = jnp.where(unable_finish[:, None, None], done_mask, new_mask)

        return dict(
            rng=rng, actions=actions, ptr=ptr, it=s["it"] + 1,
            log_prob_sum=log_prob_sum, assign_count=assign_count,
            remain_capacity=remain_capacity, route_len=route_len,
            max_from_depot=max_from_depot, dist_diff=dist_diff,
            last_node=current_customers, selected_mask=selected_mask,
            mask=new_mask, unable_finish_flag=unable_finish_flag,
            done_all=done_all)

    final = lax.while_loop(cond, body, state)
    actions = lax.dynamic_update_slice(
        final["actions"], jnp.zeros((B, V, 1), jnp.int32), (0, 0, final["ptr"]))
    n_cols = final["ptr"] + 1
    return actions, n_cols, final["log_prob_sum"], final["unable_finish_flag"]


_decode_jit = jax.jit(_decode, static_argnames=(
    "vehicle_num", "decoder_type", "unfinish_complete", "will_re_tsp",
    "n_heads_dec"))


def actor_forward(params, problems, graph_embed, avg_graph_embed, vehicle_num,
                  decoder_type="sample", unfinish_complete=False,
                  will_re_tsp=False, rng=None, n_heads_dec=4):
    if rng is None:
        rng = jax.random.PRNGKey(0)
    actions_buf, n_cols, log_probs, unable = _decode_jit(
        params, problems, graph_embed, avg_graph_embed, rng,
        vehicle_num=vehicle_num, decoder_type=decoder_type,
        unfinish_complete=unfinish_complete, will_re_tsp=will_re_tsp,
        n_heads_dec=n_heads_dec)
    n_cols = int(jax.device_get(n_cols))          # single host sync at the end
    return actions_buf[:, :, :n_cols], log_probs, unable


# ----------------------------------------------------------------------------
# Deterministic parameter init (uniform(-1/sqrt(fan_last), +1/sqrt(fan_last)))
# ----------------------------------------------------------------------------

def init_params(key, embedding_dim, context_dim):
    D, C = embedding_dim, context_dim

    def u(k, shape):
        stdv = 1.0 / math.sqrt(shape[-1])
        return jax.random.uniform(k, shape, jnp.float32, -stdv, stdv)

    ks = jax.random.split(key, 5)
    return {
        "enc_key_proj": u(ks[0], (D, D)),
        "enc_val_proj": u(ks[1], (D, D)),
        "enc_key_for_glimpse_proj": u(ks[2], (D, D)),
        "first_MHA_Wq": u(ks[3], (C, D)),
        "first_MHA_Wo": u(ks[4], (D, D)),
    }


if __name__ == "__main__":
    key = jax.random.PRNGKey(0)
    B, N, D, V = 2, 8, 32, 3          # batch, problem_size, embedding_dim, vehicles
    n_heads_dec = 4

    k1, k2, k3, k4 = jax.random.split(key, 4)
    coords = jax.random.uniform(k1, (B, N, 2), jnp.float32)
    demands = jax.random.uniform(k2, (B, N), jnp.float32, 0.05, 0.3)
    demands = demands.at[:, 0].set(0.0)                       # depot has zero demand
    problems = jnp.concatenate((coords, demands[:, :, None]), axis=2)   # (B, N, 3)

    graph_embed = 0.1 * jax.random.normal(k3, (B, N, D), jnp.float32)
    avg_graph_embed = graph_embed.mean(axis=1)                # (B, D)

    params = init_params(k4, D, 2 * D + 2)

    actions, log_probs, unable = actor_forward(
        params, problems, graph_embed, avg_graph_embed, V,
        decoder_type="sample", rng=jax.random.PRNGKey(42),
        n_heads_dec=n_heads_dec)

    jax.block_until_ready((actions, log_probs, unable))
    assert actions.shape[0] == B and actions.shape[1] == V
    assert bool(jnp.all(jnp.isfinite(log_probs)))
    assert int(actions.max()) < N and int(actions.min()) >= 0
    print("KERNEL_OK")
</pallas_src>

<mosaic_0001>
module attributes {stable_mosaic.version = 11 : i64} {
  func.func @_precompute_kernel(%arg0: i32, %arg1: memref<8x32xf32, #tpu.memory_space<vmem>>, %arg2: memref<32x96xf32, #tpu.memory_space<vmem>>, %arg3: memref<8x96xf32, #tpu.memory_space<vmem>>) attributes {dimension_semantics = [#tpu.dimension_semantics<parallel>], iteration_bounds = array<i64: 2>, scalar_prefetch = 0 : i64, scratch_operands = 0 : i64, tpu.core_type = #tpu.core_type<tc>, window_params = [{transform_indices = @transform_0, window_bounds = array<i64: 8, 32>}, {pipeline_mode = #tpu.pipeline_mode<synchronous>, transform_indices = @transform_1, window_bounds = array<i64: 32, 96>}, {transform_indices = @transform_2, window_bounds = array<i64: 8, 96>}]} {
    %c0 = arith.constant 0 : index
    %c0_0 = arith.constant 0 : index
    %0 = vector.load %arg1[%c0, %c0_0] : memref<8x32xf32, #tpu.memory_space<vmem>>, vector<8x32xf32>
    %c0_1 = arith.constant 0 : index
    %c0_2 = arith.constant 0 : index
    %1 = vector.load %arg2[%c0_1, %c0_2] : memref<32x96xf32, #tpu.memory_space<vmem>>, vector<32x96xf32>
    %cst = arith.constant dense<0.000000e+00> : vector<8x96xf32>
    %2 = tpu.matmul %0, %1, %cst {dimension_numbers = #tpu.dot_dimension_numbers<[1], [0], [0], [1], [0, 0, 1, 1], [], []>} : vector<8x32xf32>, vector<32x96xf32>, vector<8x96xf32> -> vector<8x96xf32>
    %c0_3 = arith.constant 0 : index
    %c0_4 = arith.constant 0 : index
    %3 = vector.load %arg3[%c0_3, %c0_4] : memref<8x96xf32, #tpu.memory_space<vmem>>, vector<8x96xf32>
    tpu.vector_store %arg3[%c0_3, %c0_4], %2 {strides = array<i32>} : memref<8x96xf32, #tpu.memory_space<vmem>>, vector<8x96xf32>,
    return
  }
  func.func @transform_0(%arg0: i32) -> (i32, i32) {
    %c0_i32 = arith.constant 0 : i32
    %c0_i32_0 = arith.constant 0 : i32
    return %arg0, %c0_i32 : i32, i32
  }
  func.func @transform_1(%arg0: i32) -> (i32, i32) {
    %c0_i32 = arith.constant 0 : i32
    %c0_i32_0 = arith.constant 0 : i32
    %c0_i32_1 = arith.constant 0 : i32
    return %c0_i32, %c0_i32_0 : i32, i32
  }
  func.func @transform_2(%arg0: i32) -> (i32, i32) {
    %c0_i32 = arith.constant 0 : i32
    %c0_i32_0 = arith.constant 0 : i32
    return %arg0, %c0_i32 : i32, i32
  }
}

module attributes {stable_mosaic.version = 11 : i64} {
  func.func @_decoder_step_kernel(%arg0: i32, %arg1: memref<1x3x66xf32, #tpu.memory_space<vmem>>, %arg2: memref<66x32xf32, #tpu.memory_space<vmem>>, %arg3: memref<32x32xf32, #tpu.memory_space<vmem>>, %arg4: memref<1x4x8x128xf32, #tpu.memory_space<vmem>>, %arg5: memref<1x4x128x8xf32, #tpu.memory_space<vmem>>, %arg6: memref<1x32x128xf32, #tpu.memory_space<vmem>>, %arg7: memref<1x3x128xi8, #tpu.memory_space<vmem>>, %arg8: memref<1x3x128xf32, #tpu.memory_space<vmem>>, %arg9: memref<1x3x32xf32, #tpu.memory_space<vmem>>) attributes {dimension_semantics = [#tpu.dimension_semantics<parallel>], iteration_bounds = array<i64: 2>, scalar_prefetch = 0 : i64, scratch_operands = 1 : i64, tpu.core_type = #tpu.core_type<tc>, window_params = [{transform_indices = @transform_0, window_bounds = array<i64: 1, 3, 66>}, {pipeline_mode = #tpu.pipeline_mode<synchronous>, transform_indices = @transform_1, window_bounds = array<i64: 66, 32>}, {pipeline_mode = #tpu.pipeline_mode<synchronous>, transform_indices = @transform_2, window_bounds = array<i64: 32, 32>}, {transform_indices = @transform_3, window_bounds = array<i64: 1, 4, 8, 128>}, {transform_indices = @transform_4, window_bounds = array<i64: 1, 4, 128, 8>}, {transform_indices = @transform_5, window_bounds = array<i64: 1, 32, 128>}, {transform_indices = @transform_6, window_bounds = array<i64: 1, 3, 128>}, {transform_indices = @transform_7, window_bounds = array<i64: 1, 3, 128>}]} {
    %c0 = arith.constant 0 : index
    %c0_0 = arith.constant 0 : index
    %c0_1 = arith.constant 0 : index
    %0 = vector.load %arg7[%c0, %c0_0, %c0_1] : memref<1x3x128xi8, #tpu.memory_space<vmem>>, vector<1x3x128xi8>
    %1 = arith.sitofp %0 : vector<1x3x128xi8> to vector<1x3x128xf32>
    %cst = arith.constant -1.000000e+30 : f32
    %2 = vector.broadcast %cst : f32 to vector<1x3x128xf32>
    %3 = arith.mulf %1, %2 : vector<1x3x128xf32>
    %c0_2 = arith.constant 0 : index
    %c0_3 = arith.constant 0 : index
    %c0_4 = arith.constant 0 : index
    %4 = vector.load %arg1[%c0_2, %c0_3, %c0_4] : memref<1x3x66xf32, #tpu.memory_space<vmem>>, vector<1x3x66xf32>
    %5 = vector.shape_cast %4 : vector<1x3x66xf32> to vector<3x66xf32>
    %c0_5 = arith.constant 0 : index
    %c0_6 = arith.constant 0 : index
    %6 = vector.load %arg2[%c0_5, %c0_6] : memref<66x32xf32, #tpu.memory_space<vmem>>, vector<66x32xf32>
    %cst_7 = arith.constant dense<0.000000e+00> : vector<3x32xf32>
    %7 = tpu.matmul %5, %6, %cst_7 {dimension_numbers = #tpu.dot_dimension_numbers<[1], [0], [0], [1], [0, 0, 1, 1], [], []>} : vector<3x66xf32>, vector<66x32xf32>, vector<3x32xf32> -> vector<3x32xf32>
    %8 = vector.shape_cast %7 : vector<3x32xf32> to vector<1x3x32xf32>
    %9 = vector.shape_cast %8 : vector<1x3x32xf32> to vector<3x32xf32>
    %10 = vector.extract_strided_slice %9 {offsets = [0, 0], sizes = [3, 8], strides = [1, 1]} : vector<3x32xf32> to vector<3x8xf32>
    %c0_8 = arith.constant 0 : index
    %c0_9 = arith.constant 0 : index
    %c0_10 = arith.constant 0 : index
    %c0_11 = arith.constant 0 : index
    %11 = vector.load %arg4[%c0_8, %c0_9, %c0_10, %c0_11] : memref<1x4x8x128xf32, #tpu.memory_space<vmem>>, vector<1x1x8x128xf32>
    %12 = vector.shape_cast %11 : vector<1x1x8x128xf32> to vector<8x128xf32>
    %cst_12 = arith.constant dense<0.000000e+00> : vector<3x128xf32>
    %13 = tpu.matmul %10, %12, %cst_12 {dimension_numbers = #tpu.dot_dimension_numbers<[1], [0], [0], [1], [0, 0, 1, 1], [], []>} : vector<3x8xf32>, vector<8x128xf32>, vector<3x128xf32> -> vector<3x128xf32>
    %cst_13 = arith.constant 0.353553385 : f32
    %14 = vector.broadcast %cst_13 : f32 to vector<3x128xf32>
    %15 = arith.mulf %13, %14 : vector<3x128xf32>
    %16 = vector.shape_cast %3 : vector<1x3x128xf32> to vector<3x128xf32>
    %17 = arith.addf %15, %16 : vector<3x128xf32>
    %cst_14 = arith.constant dense<0xFF800000> : vector<3xf32>
    %18 = vector.multi_reduction <maximumf>, %17, %cst_14 [1] : vector<3x128xf32> to vector<3xf32>
    %19 = vector.shape_cast %18 : vector<3xf32> to vector<3x1xf32>
    %20 = vector.broadcast %19 : vector<3x1xf32> to vector<3x128xf32>
    %21 = arith.subf %17, %20 : vector<3x128xf32>
    %22 = math.exp %21 : vector<3x128xf32>
    %cst_15 = arith.constant dense<0.000000e+00> : vector<3xf32>
    %23 = vector.multi_reduction <add>, %22, %cst_15 [1] : vector<3x128xf32> to vector<3xf32>
    %24 = vector.shape_cast %23 : vector<3xf32> to vector<3x1xf32>
    %25 = tpu.reciprocal %24 {approx = true} : vector<3x1xf32> -> vector<3x1xf32>
    %26 = vector.broadcast %25 : vector<3x1xf32> to vector<3x128xf32>
    %27 = arith.mulf %22, %26 : vector<3x128xf32>
    %c0_16 = arith.constant 0 : index
    %c0_17 = arith.constant 0 : index
    %c0_18 = arith.constant 0 : index
    %c0_19 = arith.constant 0 : index
    %28 = vector.load %arg5[%c0_16, %c0_17, %c0_18, %c0_19] : memref<1x4x128x8xf32, #tpu.memory_space<vmem>>, vector<1x1x128x8xf32>
    %29 = vector.shape_cast %28 : vector<1x1x128x8xf32> to vector<128x8xf32>
    %cst_20 = arith.constant dense<0.000000e+00> : vector<3x8xf32>
    %30 = tpu.matmul %27, %29, %cst_20 {dimension_numbers = #tpu.dot_dimension_numbers<[1], [0], [0], [1], [0, 0, 1, 1], [], []>} : vector<3x128xf32>, vector<128x8xf32>, vector<3x8xf32> -> vector<3x8xf32>
    %c0_21 = arith.constant 0 : index
    %c0_22 = arith.constant 0 : index
    %c0_23 = arith.constant 0 : index
    %31 = vector.load %arg9[%c0_21, %c0_22, %c0_23] : memref<1x3x32xf32, #tpu.memory_space<vmem>>, vector<1x3x8xf32>
    %32 = vector.shape_cast %31 : vector<1x3x8xf32> to vector<3x8xf32>
    %33 = vector.shape_cast %30 : vector<3x8xf32> to vector<1x3x8xf32>
    tpu.vector_store %arg9[%c0_21, %c0_22, %c0_23], %33 {strides = array<i32>} : memref<1x3x32xf32, #tpu.memory_space<vmem>>, vector<1x3x8xf32>,
    %34 = vector.extract_strided_slice %9 {offsets = [0, 8], sizes = [3, 8], strides = [1, 1]} : vector<3x32xf32> to vector<3x8xf32>
    %c0_24 = arith.constant 0 : index
    %c1 = arith.constant 1 : index
    %c0_25 = arith.constant 0 : index
    %c0_26 = arith.constant 0 : index
    %35 = vector.load %arg4[%c0_24, %c1, %c0_25, %c0_26] : memref<1x4x8x128xf32, #tpu.memory_space<vmem>>, vector<1x1x8x128xf32>
    %36 = vector.shape_cast %35 : vector<1x1x8x128xf32> to vector<8x128xf32>
    %cst_27 = arith.constant dense<0.000000e+00> : vector<3x128xf32>
    %37 = tpu.matmul %34, %36, %cst_27 {dimension_numbers = #tpu.dot_dimension_numbers<[1], [0], [0], [1], [0, 0, 1, 1], [], []>} : vector<3x8xf32>, vector<8x128xf32>, vector<3x128xf32> -> vector<3x128xf32>
    %cst_28 = arith.constant 0.353553385 : f32
    %38 = vector.broadcast %cst_28 : f32 to vector<3x128xf32>
    %39 = arith.mulf %37, %38 : vector<3x128xf32>
    %40 = vector.shape_cast %3 : vector<1x3x128xf32> to vector<3x128xf32>
    %41 = arith.addf %39, %40 : vector<3x128xf32>
    %cst_29 = arith.constant dense<0xFF800000> : vector<3xf32>
    %42 = vector.multi_reduction <maximumf>, %41, %cst_29 [1] : vector<3x128xf32> to vector<3xf32>
    %43 = vector.shape_cast %42 : vector<3xf32> to vector<3x1xf32>
    %44 = vector.broadcast %43 : vector<3x1xf32> to vector<3x128xf32>
    %45 = arith.subf %41, %44 : vector<3x128xf32>
    %46 = math.exp %45 : vector<3x128xf32>
    %cst_30 = arith.constant dense<0.000000e+00> : vector<3xf32>
    %47 = vector.multi_reduction <add>, %46, %cst_30 [1] : vector<3x128xf32> to vector<3xf32>
    %48 = vector.shape_cast %47 : vector<3xf32> to vector<3x1xf32>
    %49 = tpu.reciprocal %48 {approx = true} : vector<3x1xf32> -> vector<3x1xf32>
    %50 = vector.broadcast %49 : vector<3x1xf32> to vector<3x128xf32>
    %51 = arith.mulf %46, %50 : vector<3x128xf32>
    %c0_31 = arith.constant 0 : index
    %c1_32 = arith.constant 1 : index
    %c0_33 = arith.constant 0 : index
    %c0_34 = arith.constant 0 : index
    %52 = vector.load %arg5[%c0_31, %c1_32, %c0_33, %c0_34] : memref<1x4x128x8xf32, #tpu.memory_space<vmem>>, vector<1x1x128x8xf32>
    %53 = vector.shape_cast %52 : vector<1x1x128x8xf32> to vector<128x8xf32>
    %cst_35 = arith.constant dense<0.000000e+00> : vector<3x8xf32>
    %54 = tpu.matmul %51, %53, %cst_35 {dimension_numbers = #tpu.dot_dimension_numbers<[1], [0], [0], [1], [0, 0, 1, 1], [], []>} : vector<3x128xf32>, vector<128x8xf32>, vector<3x8xf32> -> vector<3x8xf32>
    %c0_36 = arith.constant 0 : index
    %c0_37 = arith.constant 0 : index
    %c8 = arith.constant 8 : index
    %55 = vector.load %arg9[%c0_36, %c0_37, %c8] : memref<1x3x32xf32, #tpu.memory_space<vmem>>, vector<1x3x8xf32>
    %56 = vector.shape_cast %55 : vector<1x3x8xf32> to vector<3x8xf32>
    %57 = vector.shape_cast %54 : vector<3x8xf32> to vector<1x3x8xf32>
    tpu.vector_store %arg9[%c0_36, %c0_37, %c8], %57 {strides = array<i32>} : memref<1x3x32xf32, #tpu.memory_space<vmem>>, vector<1x3x8xf32>,
    %58 = vector.extract_strided_slice %9 {offsets = [0, 16], sizes = [3, 8], strides = [1, 1]} : vector<3x32xf32> to vector<3x8xf32>
    %c0_38 = arith.constant 0 : index
    %c2 = arith.constant 2 : index
    %c0_39 = arith.constant 0 : index
    %c0_40 = arith.constant 0 : index
    %59 = vector.load %arg4[%c0_38, %c2, %c0_39, %c0_40] : memref<1x4x8x128xf32, #tpu.memory_space<vmem>>, vector<1x1x8x128xf32>
    %60 = vector.shape_cast %59 : vector<1x1x8x128xf32> to vector<8x128xf32>
    %cst_41 = arith.constant dense<0.000000e+00> : vector<3x128xf32>
    %61 = tpu.matmul %58, %60, %cst_41 {dimension_numbers = #tpu.dot_dimension_numbers<[1], [0], [0], [1], [0, 0, 1, 1], [], []>} : vector<3x8xf32>, vector<8x128xf32>, vector<3x128xf32> -> vector<3x128xf32>
    %cst_42 = arith.constant 0.353553385 : f32
    %62 = vector.broadcast %cst_42 : f32 to vector<3x128xf32>
    %63 = arith.mulf %61, %62 : vector<3x128xf32>
    %64 = vector.shape_cast %3 : vector<1x3x128xf32> to vector<3x128xf32>
    %65 = arith.addf %63, %64 : vector<3x128xf32>
    %cst_43 = arith.constant dense<0xFF800000> : vector<3xf32>
    %66 = vector.multi_reduction <maximumf>, %65, %cst_43 [1] : vector<3x128xf32> to vector<3xf32>
    %67 = vector.shape_cast %66 : vector<3xf32> to vector<3x1xf32>
    %68 = vector.broadcast %67 : vector<3x1xf32> to vector<3x128xf32>
    %69 = arith.subf %65, %68 : vector<3x128xf32>
    %70 = math.exp %69 : vector<3x128xf32>
    %cst_44 = arith.constant dense<0.000000e+00> : vector<3xf32>
    %71 = vector.multi_reduction <add>, %70, %cst_44 [1] : vector<3x128xf32> to vector<3xf32>
    %72 = vector.shape_cast %71 : vector<3xf32> to vector<3x1xf32>
    %73 = tpu.reciprocal %72 {approx = true} : vector<3x1xf32> -> vector<3x1xf32>
    %74 = vector.broadcast %73 : vector<3x1xf32> to vector<3x128xf32>
    %75 = arith.mulf %70, %74 : vector<3x128xf32>
    %c0_45 = arith.constant 0 : index
    %c2_46 = arith.constant 2 : index
    %c0_47 = arith.constant 0 : index
    %c0_48 = arith.constant 0 : index
    %76 = vector.load %arg5[%c0_45, %c2_46, %c0_47, %c0_48] : memref<1x4x128x8xf32, #tpu.memory_space<vmem>>, vector<1x1x128x8xf32>
    %77 = vector.shape_cast %76 : vector<1x1x128x8xf32> to vector<128x8xf32>
    %cst_49 = arith.constant dense<0.000000e+00> : vector<3x8xf32>
    %78 = tpu.matmul %75, %77, %cst_49 {dimension_numbers = #tpu.dot_dimension_numbers<[1], [0], [0], [1], [0, 0, 1, 1], [], []>} : vector<3x128xf32>, vector<128x8xf32>, vector<3x8xf32> -> vector<3x8xf32>
    %c0_50 = arith.constant 0 : index
    %c0_51 = arith.constant 0 : index
    %c16 = arith.constant 16 : index
    %79 = vector.load %arg9[%c0_50, %c0_51, %c16] : memref<1x3x32xf32, #tpu.memory_space<vmem>>, vector<1x3x8xf32>
    %80 = vector.shape_cast %79 : vector<1x3x8xf32> to vector<3x8xf32>
    %81 = vector.shape_cast %78 : vector<3x8xf32> to vector<1x3x8xf32>
    tpu.vector_store %arg9[%c0_50, %c0_51, %c16], %81 {strides = array<i32>} : memref<1x3x32xf32, #tpu.memory_space<vmem>>, vector<1x3x8xf32>,
    %82 = vector.extract_strided_slice %9 {offsets = [0, 24], sizes = [3, 8], strides = [1, 1]} : vector<3x32xf32> to vector<3x8xf32>
    %c0_52 = arith.constant 0 : index
    %c3 = arith.constant 3 : index
    %c0_53 = arith.constant 0 : index
    %c0_54 = arith.constant 0 : index
    %83 = vector.load %arg4[%c0_52, %c3, %c0_53, %c0_54] : memref<1x4x8x128xf32, #tpu.memory_space<vmem>>, vector<1x1x8x128xf32>
    %84 = vector.shape_cast %83 : vector<1x1x8x128xf32> to vector<8x128xf32>
    %cst_55 = arith.constant dense<0.000000e+00> : vector<3x128xf32>
    %85 = tpu.matmul %82, %84, %cst_55 {dimension_numbers = #tpu.dot_dimension_numbers<[1], [0], [0], [1], [0, 0, 1, 1], [], []>} : vector<3x8xf32>, vector<8x128xf32>, vector<3x128xf32> -> vector<3x128xf32>
    %cst_56 = arith.constant 0.353553385 : f32
    %86 = vector.broadcast %cst_56 : f32 to vector<3x128xf32>
    %87 = arith.mulf %85, %86 : vector<3x128xf32>
    %88 = vector.shape_cast %3 : vector<1x3x128xf32> to vector<3x128xf32>
    %89 = arith.addf %87, %88 : vector<3x128xf32>
    %cst_57 = arith.constant dense<0xFF800000> : vector<3xf32>
    %90 = vector.multi_reduction <maximumf>, %89, %cst_57 [1] : vector<3x128xf32> to vector<3xf32>
    %91 = vector.shape_cast %90 : vector<3xf32> to vector<3x1xf32>
    %92 = vector.broadcast %91 : vector<3x1xf32> to vector<3x128xf32>
    %93 = arith.subf %89, %92 : vector<3x128xf32>
    %94 = math.exp %93 : vector<3x128xf32>
    %cst_58 = arith.constant dense<0.000000e+00> : vector<3xf32>
    %95 = vector.multi_reduction <add>, %94, %cst_58 [1] : vector<3x128xf32> to vector<3xf32>
    %96 = vector.shape_cast %95 : vector<3xf32> to vector<3x1xf32>
    %97 = tpu.reciprocal %96 {approx = true} : vector<3x1xf32> -> vector<3x1xf32>
    %98 = vector.broadcast %97 : vector<3x1xf32> to vector<3x128xf32>
    %99 = arith.mulf %94, %98 : vector<3x128xf32>
    %c0_59 = arith.constant 0 : index
    %c3_60 = arith.constant 3 : index
    %c0_61 = arith.constant 0 : index
    %c0_62 = arith.constant 0 : index
    %100 = vector.load %arg5[%c0_59, %c3_60, %c0_61, %c0_62] : memref<1x4x128x8xf32, #tpu.memory_space<vmem>>, vector<1x1x128x8xf32>
    %101 = vector.shape_cast %100 : vector<1x1x128x8xf32> to vector<128x8xf32>
    %cst_63 = arith.constant dense<0.000000e+00> : vector<3x8xf32>
    %102 = tpu.matmul %99, %101, %cst_63 {dimension_numbers = #tpu.dot_dimension_numbers<[1], [0], [0], [1], [0, 0, 1, 1], [], []>} : vector<3x128xf32>, vector<128x8xf32>, vector<3x8xf32> -> vector<3x8xf32>
    %c0_64 = arith.constant 0 : index
    %c0_65 = arith.constant 0 : index
    %c24 = arith.constant 24 : index
    %103 = vector.load %arg9[%c0_64, %c0_65, %c24] : memref<1x3x32xf32, #tpu.memory_space<vmem>>, vector<1x3x8xf32>
    %104 = vector.shape_cast %103 : vector<1x3x8xf32> to vector<3x8xf32>
    %105 = vector.shape_cast %102 : vector<3x8xf32> to vector<1x3x8xf32>
    tpu.vector_store %arg9[%c0_64, %c0_65, %c24], %105 {strides = array<i32>} : memref<1x3x32xf32, #tpu.memory_space<vmem>>, vector<1x3x8xf32>,
    %c0_66 = arith.constant 0 : index
    %c0_67 = arith.constant 0 : index
    %c0_68 = arith.constant 0 : index
    %106 = vector.load %arg9[%c0_66, %c0_67, %c0_68] : memref<1x3x32xf32, #tpu.memory_space<vmem>>, vector<1x3x32xf32>
    %107 = vector.shape_cast %106 : vector<1x3x32xf32> to vector<3x32xf32>
    %c0_69 = arith.constant 0 : index
    %c0_70 = arith.constant 0 : index
    %108 = vector.load %arg3[%c0_69, %c0_70] : memref<32x32xf32, #tpu.memory_space<vmem>>, vector<32x32xf32>
    %cst_71 = arith.constant dense<0.000000e+00> : vector<3x32xf32>
    %109 = tpu.matmul %107, %108, %cst_71 {dimension_numbers = #tpu.dot_dimension_numbers<[1], [0], [0], [1], [0, 0, 1, 1], [], []>} : vector<3x32xf32>, vector<32x32xf32>, vector<3x32xf32> -> vector<3x32xf32>
    %110 = vector.shape_cast %109 : vector<3x32xf32> to vector<1x3x32xf32>
    %111 = vector.shape_cast %110 : vector<1x3x32xf32> to vector<3x32xf32>
    %c0_72 = arith.constant 0 : index
    %c0_73 = arith.constant 0 : index
    %c0_74 = arith.constant 0 : index
    %112 = vector.load %arg6[%c0_72, %c0_73, %c0_74] : memref<1x32x128xf32, #tpu.memory_space<vmem>>, vector<1x32x128xf32>
    %113 = vector.shape_cast %112 : vector<1x32x128xf32> to vector<32x128xf32>
    %cst_75 = arith.constant dense<0.000000e+00> : vector<3x128xf32>
    %114 = tpu.matmul %111, %113, %cst_75 {dimension_numbers = #tpu.dot_dimension_numbers<[1], [0], [0], [1], [0, 0, 1, 1], [], []>} : vector<3x32xf32>, vector<32x128xf32>, vector<3x128xf32> -> vector<3x128xf32>
    %cst_76 = arith.constant 0.176776692 : f32
    %115 = vector.broadcast %cst_76 : f32 to vector<3x128xf32>
    %116 = arith.mulf %114, %115 : vector<3x128xf32>
    %117 = math.tanh %116 : vector<3x128xf32>
    %cst_77 = arith.constant 1.000000e+01 : f32
    %118 = vector.broadcast %cst_77 : f32 to vector<3x128xf32>
    %119 = arith.mulf %118, %117 : vector<3x128xf32>
    %120 = vector.shape_cast %1 : vector<1x3x128xf32> to vector<3x128xf32>
    %cst_78 = arith.constant 5.000000e-01 : f32
    %121 = vector.broadcast %cst_78 : f32 to vector<3x128xf32>
    %122 = arith.cmpf ogt, %120, %121 : vector<3x128xf32>
    %cst_79 = arith.constant -1.000000e+30 : f32
    %123 = vector.broadcast %cst_79 : f32 to vector<3x128xf32>
    %124 = arith.select %122, %123, %119 : vector<3x128xi1>, vector<3x128xf32>
    %c0_80 = arith.constant 0 : index
    %c0_81 = arith.constant 0 : index
    %c0_82 = arith.constant 0 : index
    %125 = vector.load %arg8[%c0_80, %c0_81, %c0_82] : memref<1x3x128xf32, #tpu.memory_space<vmem>>, vector<1x3x128xf32>
    %126 = vector.shape_cast %125 : vector<1x3x128xf32> to vector<3x128xf32>
    %127 = vector.shape_cast %124 : vector<3x128xf32> to vector<1x3x128xf32>
    tpu.vector_store %arg8[%c0_80, %c0_81, %c0_82], %127 {strides = array<i32>} : memref<1x3x128xf32, #tpu.memory_space<vmem>>, vector<1x3x128xf32>,
    return
  }
  func.func @transform_0(%arg0: i32) -> (i32, i32, i32) {
    %c0_i32 = arith.constant 0 : i32
    %c0_i32_0 = arith.constant 0 : i32
    %c0_i32_1 = arith.constant 0 : i32
    return %arg0, %c0_i32, %c0_i32_0 : i32, i32, i32
  }
  func.func @transform_1(%arg0: i32) -> (i32, i32) {
    %c0_i32 = arith.constant 0 : i32
    %c0_i32_0 = arith.constant 0 : i32
    %c0_i32_1 = arith.constant 0 : i32
    return %c0_i32, %c0_i32_0 : i32, i32
  }
  func.func @transform_2(%arg0: i32) -> (i32, i32) {
    %c0_i32 = arith.constant 0 : i32
    %c0_i32_0 = arith.constant 0 : i32
    %c0_i32_1 = arith.constant 0 : i32
    return %c0_i32, %c0_i32_0 : i32, i32
  }
  func.func @transform_3(%arg0: i32) -> (i32, i32, i32, i32) {
    %c0_i32 = arith.constant 0 : i32
    %c0_i32_0 = arith.constant 0 : i32
    %c0_i32_1 = arith.constant 0 : i32
    %c0_i32_2 = arith.constant 0 : i32
    return %arg0, %c0_i32, %c0_i32_0, %c0_i32_1 : i32, i32, i32, i32
  }
  func.func @transform_4(%arg0: i32) -> (i32, i32, i32, i32) {
    %c0_i32 = arith.constant 0 : i32
    %c0_i32_0 = arith.constant 0 : i32
    %c0_i32_1 = arith.constant 0 : i32
    %c0_i32_2 = arith.constant 0 : i32
    return %arg0, %c0_i32, %c0_i32_0, %c0_i32_1 : i32, i32, i32, i32
  }
  func.func @transform_5(%arg0: i32) -> (i32, i32, i32) {
    %c0_i32 = arith.constant 0 : i32
    %c0_i32_0 = arith.constant 0 : i32
    %c0_i32_1 = arith.constant 0 : i32
    return %arg0, %c0_i32, %c0_i32_0 : i32, i32, i32
  }
  func.func @transform_6(%arg0: i32) -> (i32, i32, i32) {
    %c0_i32 = arith.constant 0 : i32
    %c0_i32_0 = arith.constant 0 : i32
    %c0_i32_1 = arith.constant 0 : i32
    return %arg0, %c0_i32, %c0_i32_0 : i32, i32, i32
  }
  func.func @transform_7(%arg0: i32) -> (i32, i32, i32) {
    %c0_i32 = arith.constant 0 : i32
    %c0_i32_0 = arith.constant 0 : i32
    %c0_i32_1 = arith.constant 0 : i32
    return %arg0, %c0_i32, %c0_i32_0 : i32, i32, i32
  }
}

</mosaic_0001>

<llo_original>
// kernel: _decode.1
$region0: #{_decode.1}
  #allocation0 [shape = 'u32[]', space=smem, size = 0x4, offset = 0x4, fixed_abs, tag = 'smem constant byte address 0x4 - core index']
  #allocation1 [shape = 'u32[72,128]{1,0:T(1,128)}', space=vmem, size = 0x9000, scoped, tag = 'internal scratch']
  %s0 = inlined_call_operand.vmem [shape: f32[16,32], index: 0, kind: input, shape index: {}]
  %s1 = inlined_call_operand.vmem [shape: f32[32,96], index: 1, kind: input, shape index: {}]
  %s2 = inlined_call_operand.vmem [shape: f32[16,96], index: 2, kind: output, shape index: {}]
  %s3 = sld [smem:[#allocation0]]
  $region41: #{_decode.1} parent=0
    _
  %s5 = ssub.s32 1, %s3
  %s6 = scalar_select 0, %s5, %s3
  loop: start=0, step=1, limit=4
  $region2: #{_decode.1} parent=0 // loop_pre_header
    _
  $region3: #{_decode.1} parent=0 // loop_header
    %s8 = sphi 0, %s12
    %p9 = scmp.ge.s32.totalorder %s8, 4
    %s18 = sphi 0, %s20
    %s21 = sphi 0, %s18
    %s22 = sphi 0, %s21
    %s38 = sphi 0, %s22
    %s42 = sphi 0, %s42
    %s44 = sphi 0, %s42
    %s45 = sphi 0, %s44
    %s59 = sphi 0, %s45
    %s65 = sphi 0, %s67
    %s68 = sphi 0, %s65
    %s69 = sphi 0, %s68
    %s85 = sphi 0, %s69
  $region4: #{_decode.1} parent=0 // loop_header_branch
    %11 = sbr.rel (%p9) target = $region8
  $region5: #{_decode.1} parent=0 // loop_body
    %s13 = ssub.s32 %s8, 1
    %s14 = ssub.s32 %s8, 2
    %s15 = sadd.s32 %s8, 1
    %s16 = ssub.s32 %s8, %s15
    %p17 = scmp.eq.s32.totalorder %s16, 0
    %s19 = sadd.s32 %s18, 1
    %s20 = scalar_select %p17, %s18, %s19
    %p23 = pneg %p17
    %p24 = scmp.eq.s32.totalorder %s8, 1
    %p25 = por %p23, %p24
    %p26 = scmp.ne.s32.totalorder %s18, %s21
    %p27 = scmp.eq.s32.totalorder %s8, 0
    %p28 = por %p26, %p27
    %p29 = scmp.ne.s32.totalorder %s18, %s21
    %p30 = scmp.eq.s32.totalorder %s13, 1
    %p31 = por %p29, %p30
    %p32 = scmp.ne.s32.totalorder %s21, %s22
    %p33 = scmp.eq.s32.totalorder %s13, 0
    %p34 = por %p32, %p33
    %p35 = scmp.ne.s32.totalorder %s21, %s22
    %p36 = scmp.eq.s32.totalorder %s14, 1
    %p37 = por %p35, %p36
    %p39 = scmp.ne.s32.totalorder %s22, %s38
    %p40 = scmp.eq.s32.totalorder %s14, 0
    %p41 = por %p39, %p40
    %s43 = sadd.s32 %s42, 1
    %p46 = scmp.eq.s32.totalorder %s8, 1
    %p47 = scmp.ne.s32.totalorder %s42, %s44
    %p48 = scmp.eq.s32.totalorder %s8, 0
    %p49 = por %p47, %p48
    %p50 = scmp.ne.s32.totalorder %s42, %s44
    %p51 = scmp.eq.s32.totalorder %s13, 1
    %p52 = por %p50, %p51
    %p53 = scmp.ne.s32.totalorder %s44, %s45
    %p54 = scmp.eq.s32.totalorder %s13, 0
    %p55 = por %p53, %p54
    %p56 = scmp.ne.s32.totalorder %s44, %s45
    %p57 = scmp.eq.s32.totalorder %s14, 1
    %p58 = por %p56, %p57
    %p60 = scmp.ne.s32.totalorder %s45, %s59
    %p61 = scmp.eq.s32.totalorder %s14, 0
    %p62 = por %p60, %p61
    %s63 = ssub.s32 %s8, %s15
    %p64 = scmp.eq.s32.totalorder %s63, 0
    %s66 = sadd.s32 %s65, 1
    %s67 = scalar_select %p64, %s65, %s66
    %p70 = pneg %p64
    %p71 = scmp.eq.s32.totalorder %s8, 1
    %p72 = por %p70, %p71
    %p73 = scmp.ne.s32.totalorder %s65, %s68
    %p74 = scmp.eq.s32.totalorder %s8, 0
    %p75 = por %p73, %p74
    %p76 = scmp.ne.s32.totalorder %s65, %s68
    %p77 = scmp.eq.s32.totalorder %s13, 1
    %p78 = por %p76, %p77
    %p79 = scmp.ne.s32.totalorder %s68, %s69
    %p80 = scmp.eq.s32.totalorder %s13, 0
    %p81 = por %p79, %p80
    %p82 = scmp.ne.s32.totalorder %s68, %s69
    %p83 = scmp.eq.s32.totalorder %s14, 1
    %p84 = por %p82, %p83
    %p86 = scmp.ne.s32.totalorder %s69, %s85
    %p87 = scmp.eq.s32.totalorder %s14, 0
    %p88 = por %p86, %p87
    %p89 = scmp.le.s32.totalorder 1, %s8
    %p90 = scmp.lt.s32.totalorder %s8, 3
    %p91 = pnand %p89, %p90
    %p92 = pneg %p91
    // Predicated region
    $region9: #{_decode.1} parent=5 // pred_check
      _
    $region10: #{_decode.1} parent=5 // pred_check_branch
      %94 = sbr.rel (%p91) target = $region12
    $region11: #{_decode.1} parent=5 // pred_region
      %s95 = ssub.s32 %s8, 1
      // Predicated region
      $region13: #{_decode.1} parent=11 // pred_check
        %p96 = pneg %p55
      $region14: #{_decode.1} parent=11 // pred_check_branch
        %98 = sbr.rel (%p96) target = $region16
      $region15: #{_decode.1} parent=11 // pred_region
        _
      $region16: #{_decode.1} parent=11 // pred_fallthru
        _
    $region12: #{_decode.1} parent=5 // pred_fallthru
      _
    %p99 = scmp.lt.s32.totalorder %s8, 2
    // Predicated region
    $region17: #{_decode.1} parent=5 // pred_check
      %p100 = pneg %p99
    $region18: #{_decode.1} parent=5 // pred_check_branch
      %102 = sbr.rel (%p100) target = $region20
    $region19: #{_decode.1} parent=5 // pred_region
      // Predicated region
      $region21: #{_decode.1} parent=19 // pred_check
        %p103 = pneg %p28
      $region22: #{_decode.1} parent=19 // pred_check_branch
        %105 = sbr.rel (%p103) target = $region24
      $region23: #{_decode.1} parent=19 // pred_region
        %p106 = scmp.lt.s32.totalorder %s8, 1
        %s107 = scalar_select %p106, %s8, 1
        %s108 = smul.addr %s107, 8
        %s109 = scalar_lea.vmem %s0, %s108
      $region24: #{_decode.1} parent=19 // pred_fallthru
        _
    $region20: #{_decode.1} parent=5 // pred_fallthru
      _
    %p110 = scmp.le.s32.totalorder 1, %s8
    %p111 = scmp.lt.s32.totalorder %s8, 3
    %p112 = pnand %p110, %p111
    %p113 = pneg %p112
    // Predicated region
    $region25: #{_decode.1} parent=5 // pred_check
      _
    $region26: #{_decode.1} parent=5 // pred_check_branch
      %115 = sbr.rel (%p112) target = $region28
    $region27: #{_decode.1} parent=5 // pred_region
      %s116 = ssub.s32 %s8, 1
      %p117 = scmp.lt.s32.totalorder %s13, 1
      %s118 = scalar_select %p117, %s13, 1
      %s119 = smul.addr %s118, 8
      %s120 = scalar_lea.vmem %s0, %s119
      %p121 = pneg %p34
      %p122 = pneg %p31
      %p123 = pneg %p55
      %p124 = pneg %p52
      %p125 = pneg %p81
      %p126 = pneg %p78
      %p127 = scmp.lt.s32.totalorder %s13, 1
      %s128 = scalar_select %p127, %s13, 1
      %s129 = smul.addr %s128, 8
      %s130 = scalar_lea.vmem %s2, %s129
      %p131 = scmp.lt.s32.totalorder %s13, 1
      %s132 = scalar_select %p131, %s13, 1
      %s133 = smul.addr %s132, 8
      %s134 = scalar_lea.vmem %s0, %s133
      %p135 = scmp.lt.s32.totalorder %s13, 1
      %s136 = scalar_select %p135, %s13, 1
      %s137 = smul.addr %s136, 8
      %s138 = scalar_lea.vmem %s2, %s137
      %v139 = vld [vmem:[%s134] sm:$0xff]
      %v140 = vld [vmem:[%s1] sm:$0xff]
      %v141 = vld [vmem:[%s1 + $0x8] sm:$0xff]
      %v142 = vld [vmem:[%s1 + $0x10] sm:$0xff]
      %v143 = vld [vmem:[%s1 + $0x18] sm:$0xff]
      %vm144 = vcmask 261120
      %v146 = vsel %vm144, %v139, 0
      %148 = vmatpush.msra.mxu0 0.0
      %149 = vmatpush.msra.mxu0 0.0
      %150 = vmatpush.msra.mxu0 0.0
      %151 = vmatpush.msra.mxu0 0.0
      %152 = vmatpush.msra.mxu0 0.0
      %153 = vmatpush.msra.mxu0 0.0
      %154 = vmatpush.msra.mxu0 0.0
      %155 = vmatpush.msra.mxu0 0.0
      %156 = vmatpush.msra.mxu0 0.0
      %157 = vmatpush.msra.mxu0 0.0
      %158 = vmatpush.msra.mxu0 0.0
      %159 = vmatpush.msra.mxu0 0.0
      %160 = vmatpush.msra.mxu0 %v143
      %161 = vmatpush.msra.mxu0 %v142
      %162 = vmatpush.msra.mxu0 %v141
      %163 = vmatpush.msra.mxu0 %v140
      %164 = vmatmul.f32.gmra.mxu0 %v146
      %v165 = vpop.f32.mrf.mxu0
      %v166 = vadd.f32 0.0, %v165
      %167 = vdwg.mxu0
      %vm168 = vcmask 785408
      %169 = vst.msk [vmem:[%s138] sm:$0xff] %vm168, %v166
      %p170 = scmp.lt.s32.totalorder %s13, 1
      %s171 = scalar_select %p170, %s13, 1
      %s172 = smul.addr %s171, 8
      %s173 = scalar_lea.vmem %s2, %s172
      // Predicated region
      $region29: #{_decode.1} parent=27 // pred_check
        %p174 = pneg %p78
      $region30: #{_decode.1} parent=27 // pred_check_branch
        %176 = sbr.rel (%p174) target = $region32
      $region31: #{_decode.1} parent=27 // pred_region
        _
      $region32: #{_decode.1} parent=27 // pred_fallthru
        _
    $region28: #{_decode.1} parent=5 // pred_fallthru
      _
    %p177 = scmp.le.s32.totalorder 2, %s8
    // Predicated region
    $region33: #{_decode.1} parent=5 // pred_check
      %p178 = pneg %p177
    $region34: #{_decode.1} parent=5 // pred_check_branch
      %180 = sbr.rel (%p178) target = $region36
    $region35: #{_decode.1} parent=5 // pred_region
      %s181 = ssub.s32 %s8, 2
      // Predicated region
      $region37: #{_decode.1} parent=35 // pred_check
        %p182 = pneg %p84
      $region38: #{_decode.1} parent=35 // pred_check_branch
        %184 = sbr.rel (%p182) target = $region40
      $region39: #{_decode.1} parent=35 // pred_region
        %p185 = scmp.lt.s32.totalorder %s14, 1
        %s186 = scalar_select %p185, %s14, 1
        %s187 = smul.addr %s186, 8
        %s188 = scalar_lea.vmem %s2, %s187
      $region40: #{_decode.1} parent=35 // pred_fallthru
        _
    $region36: #{_decode.1} parent=5 // pred_fallthru
      _
  $region6: #{_decode.1} parent=0 // loop_footer
    %s12 = sadd.s32 1, %s8
  $region7: #{_decode.1} parent=0 // loop_footer_branch
    %7 = sbr.rel target = $region3
  $region8: #{_decode.1} parent=0 // loop_exit
    _

// kernel: neg.37
$region0: #{neg.37}
  #allocation0 [shape = 's32[1]{0}', space=sflag, size = 0x4, scoped, tag = 'scoped memory for neg.37']
  %s0 = inlined_call_operand.vmem [shape: f32[2], index: 0, kind: input, shape index: {}]
  %s1 = inlined_call_operand.vmem [shape: f32[2], index: 1, kind: output, shape index: {}]
  %v2 = vld [vmem:[%s0] sm:$0x1]
  %3 = xla_tuple %v2
  %4 = xla_tuple %3
  %v5 = vxor.u32 %v2, 2147483648
  %6 = xla_tuple %v5
  %7 = vst [vmem:[%s1] sm:$0x1] %v5

// kernel: body.12
$region0: #{body.12}
  #allocation0 [shape = 'u32[]', space=smem, size = 0x4, offset = 0x4, fixed_abs, tag = 'smem constant byte address 0x4 - core index']
  #allocation1 [shape = 'u32[72,128]{1,0:T(1,128)}', space=vmem, size = 0x9000, scoped, tag = 'internal scratch']
  #allocation2 [shape = 'f32[1,3,32]{2,1,0:T(4,128)}', space=vmem, size = 0x800, scoped, tag = 'scratch operand']
  %s0 = inlined_call_operand.vmem [shape: f32[2,3,66], index: 0, kind: input, shape index: {}]
  %s1 = inlined_call_operand.vmem [shape: f32[66,32], index: 1, kind: input, shape index: {}]
  %s2 = inlined_call_operand.vmem [shape: f32[32,32], index: 2, kind: input, shape index: {}]
  %s3 = inlined_call_operand.vmem [shape: f32[2,4,8,128], index: 3, kind: input, shape index: {}]
  %s4 = inlined_call_operand.vmem [shape: f32[2,4,128,8], index: 4, kind: input, shape index: {}]
  %s5 = inlined_call_operand.vmem [shape: f32[2,32,128], index: 5, kind: input, shape index: {}]
  %s6 = inlined_call_operand.vmem [shape: s8[2,3,128], index: 6, kind: input, shape index: {}]
  %s7 = inlined_call_operand.vmem [shape: f32[2,3,128], index: 7, kind: output, shape index: {}]
  %s8 = sld [smem:[#allocation0]]
  $region61: #{body.12} parent=0
    _
  %s10 = ssub.s32 1, %s8
  %s11 = scalar_select 0, %s10, %s8
  loop: start=0, step=1, limit=4
  $region2: #{body.12} parent=0 // loop_pre_header
    _
  $region3: #{body.12} parent=0 // loop_header
    %s13 = sphi 0, %s17
    %p14 = scmp.ge.s32.totalorder %s13, 4
    %s23 = sphi 0, %s25
    %s26 = sphi 0, %s23
    %s27 = sphi 0, %s26
    %s43 = sphi 0, %s27
    %s47 = sphi 0, %s47
    %s49 = sphi 0, %s47
    %s50 = sphi 0, %s49
    %s64 = sphi 0, %s50
    %s68 = sphi 0, %s68
    %s70 = sphi 0, %s68
    %s71 = sphi 0, %s70
    %s85 = sphi 0, %s71
    %s91 = sphi 0, %s93
    %s94 = sphi 0, %s91
    %s95 = sphi 0, %s94
    %s111 = sphi 0, %s95
    %s117 = sphi 0, %s119
    %s120 = sphi 0, %s117
    %s121 = sphi 0, %s120
    %s137 = sphi 0, %s121
    %s143 = sphi 0, %s145
    %s146 = sphi 0, %s143
    %s147 = sphi 0, %s146
    %s163 = sphi 0, %s147
    %s169 = sphi 0, %s171
    %s172 = sphi 0, %s169
    %s173 = sphi 0, %s172
    %s189 = sphi 0, %s173
    %s195 = sphi 0, %s197
    %s198 = sphi 0, %s195
    %s199 = sphi 0, %s198
    %s215 = sphi 0, %s199
  $region4: #{body.12} parent=0 // loop_header_branch
    %16 = sbr.rel (%p14) target = $region8
  $region5: #{body.12} parent=0 // loop_body
    %s18 = ssub.s32 %s13, 1
    %s19 = ssub.s32 %s13, 2
    %s20 = sadd.s32 %s13, 1
    %s21 = ssub.s32 %s13, %s20
    %p22 = scmp.eq.s32.totalorder %s21, 0
    %s24 = sadd.s32 %s23, 1
    %s25 = scalar_select %p22, %s23, %s24
    %p28 = pneg %p22
    %p29 = scmp.eq.s32.totalorder %s13, 1
    %p30 = por %p28, %p29
    %p31 = scmp.ne.s32.totalorder %s23, %s26
    %p32 = scmp.eq.s32.totalorder %s13, 0
    %p33 = por %p31, %p32
    %p34 = scmp.ne.s32.totalorder %s23, %s26
    %p35 = scmp.eq.s32.totalorder %s18, 1
    %p36 = por %p34, %p35
    %p37 = scmp.ne.s32.totalorder %s26, %s27
    %p38 = scmp.eq.s32.totalorder %s18, 0
    %p39 = por %p37, %p38
    %p40 = scmp.ne.s32.totalorder %s26, %s27
    %p41 = scmp.eq.s32.totalorder %s19, 1
    %p42 = por %p40, %p41
    %p44 = scmp.ne.s32.totalorder %s27, %s43
    %p45 = scmp.eq.s32.totalorder %s19, 0
    %p46 = por %p44, %p45
    %s48 = sadd.s32 %s47, 1
    %p51 = scmp.eq.s32.totalorder %s13, 1
    %p52 = scmp.ne.s32.totalorder %s47, %s49
    %p53 = scmp.eq.s32.totalorder %s13, 0
    %p54 = por %p52, %p53
    %p55 = scmp.ne.s32.totalorder %s47, %s49
    %p56 = scmp.eq.s32.totalorder %s18, 1
    %p57 = por %p55, %p56
    %p58 = scmp.ne.s32.totalorder %s49, %s50
    %p59 = scmp.eq.s32.totalorder %s18, 0
    %p60 = por %p58, %p59
    %p61 = scmp.ne.s32.totalorder %s49, %s50
    %p62 = scmp.eq.s32.totalorder %s19, 1
    %p63 = por %p61, %p62
    %p65 = scmp.ne.s32.totalorder %s50, %s64
    %p66 = scmp.eq.s32.totalorder %s19, 0
    %p67 = por %p65, %p66
    %s69 = sadd.s32 %s68, 1
    %p72 = scmp.eq.s32.totalorder %s13, 1
    %p73 = scmp.ne.s32.totalorder %s68, %s70
    %p74 = scmp.eq.s32.totalorder %s13, 0
    %p75 = por %p73, %p74
    %p76 = scmp.ne.s32.totalorder %s68, %s70
    %p77 = scmp.eq.s32.totalorder %s18, 1
    %p78 = por %p76, %p77
    %p79 = scmp.ne.s32.totalorder %s70, %s71
    %p80 = scmp.eq.s32.totalorder %s18, 0
    %p81 = por %p79, %p80
    %p82 = scmp.ne.s32.totalorder %s70, %s71
    %p83 = scmp.eq.s32.totalorder %s19, 1
    %p84 = por %p82, %p83
    %p86 = scmp.ne.s32.totalorder %s71, %s85
    %p87 = scmp.eq.s32.totalorder %s19, 0
    %p88 = por %p86, %p87
    %s89 = ssub.s32 %s13, %s20
    %p90 = scmp.eq.s32.totalorder %s89, 0
    %s92 = sadd.s32 %s91, 1
    %s93 = scalar_select %p90, %s91, %s92
    %p96 = pneg %p90
    %p97 = scmp.eq.s32.totalorder %s13, 1
    %p98 = por %p96, %p97
    %p99 = scmp.ne.s32.totalorder %s91, %s94
    %p100 = scmp.eq.s32.totalorder %s13, 0
    %p101 = por %p99, %p100
    %p102 = scmp.ne.s32.totalorder %s91, %s94
    %p103 = scmp.eq.s32.totalorder %s18, 1
    %p104 = por %p102, %p103
    %p105 = scmp.ne.s32.totalorder %s94, %s95
    %p106 = scmp.eq.s32.totalorder %s18, 0
    %p107 = por %p105, %p106
    %p108 = scmp.ne.s32.totalorder %s94, %s95
    %p109 = scmp.eq.s32.totalorder %s19, 1
    %p110 = por %p108, %p109
    %p112 = scmp.ne.s32.totalorder %s95, %s111
    %p113 = scmp.eq.s32.totalorder %s19, 0
    %p114 = por %p112, %p113
    %s115 = ssub.s32 %s13, %s20
    %p116 = scmp.eq.s32.totalorder %s115, 0
    %s118 = sadd.s32 %s117, 1
    %s119 = scalar_select %p116, %s117, %s118
    %p122 = pneg %p116
    %p123 = scmp.eq.s32.totalorder %s13, 1
    %p124 = por %p122, %p123
    %p125 = scmp.ne.s32.totalorder %s117, %s120
    %p126 = scmp.eq.s32.totalorder %s13, 0
    %p127 = por %p125, %p126
    %p128 = scmp.ne.s32.totalorder %s117, %s120
    %p129 = scmp.eq.s32.totalorder %s18, 1
    %p130 = por %p128, %p129
    %p131 = scmp.ne.s32.totalorder %s120, %s121
    %p132 = scmp.eq.s32.totalorder %s18, 0
    %p133 = por %p131, %p132
    %p134 = scmp.ne.s32.totalorder %s120, %s121
    %p135 = scmp.eq.s32.totalorder %s19, 1
    %p136 = por %p134, %p135
    %p138 = scmp.ne.s32.totalorder %s121, %s137
    %p139 = scmp.eq.s32.totalorder %s19, 0
    %p140 = por %p138, %p139
    %s141 = ssub.s32 %s13, %s20
    %p142 = scmp.eq.s32.totalorder %s141, 0
    %s144 = sadd.s32 %s143, 1
    %s145 = scalar_select %p142, %s143, %s144
    %p148 = pneg %p142
    %p149 = scmp.eq.s32.totalorder %s13, 1
    %p150 = por %p148, %p149
    %p151 = scmp.ne.s32.totalorder %s143, %s146
    %p152 = scmp.eq.s32.totalorder %s13, 0
    %p153 = por %p151, %p152
    %p154 = scmp.ne.s32.totalorder %s143, %s146
    %p155 = scmp.eq.s32.totalorder %s18, 1
    %p156 = por %p154, %p155
    %p157 = scmp.ne.s32.totalorder %s146, %s147
    %p158 = scmp.eq.s32.totalorder %s18, 0
    %p159 = por %p157, %p158
    %p160 = scmp.ne.s32.totalorder %s146, %s147
    %p161 = scmp.eq.s32.totalorder %s19, 1
    %p162 = por %p160, %p161
    %p164 = scmp.ne.s32.totalorder %s147, %s163
    %p165 = scmp.eq.s32.totalorder %s19, 0
    %p166 = por %p164, %p165
    %s167 = ssub.s32 %s13, %s20
    %p168 = scmp.eq.s32.totalorder %s167, 0
    %s170 = sadd.s32 %s169, 1
    %s171 = scalar_select %p168, %s169, %s170
    %p174 = pneg %p168
    %p175 = scmp.eq.s32.totalorder %s13, 1
    %p176 = por %p174, %p175
    %p177 = scmp.ne.s32.totalorder %s169, %s172
    %p178 = scmp.eq.s32.totalorder %s13, 0
    %p179 = por %p177, %p178
    %p180 = scmp.ne.s32.totalorder %s169, %s172
    %p181 = scmp.eq.s32.totalorder %s18, 1
    %p182 = por %p180, %p181
    %p183 = scmp.ne.s32.totalorder %s172, %s173
    %p184 = scmp.eq.s32.totalorder %s18, 0
    %p185 = por %p183, %p184
    %p186 = scmp.ne.s32.totalorder %s172, %s173
    %p187 = scmp.eq.s32.totalorder %s19, 1
    %p188 = por %p186, %p187
    %p190 = scmp.ne.s32.totalorder %s173, %s189
    %p191 = scmp.eq.s32.totalorder %s19, 0
    %p192 = por %p190, %p191
    %s193 = ssub.s32 %s13, %s20
    %p194 = scmp.eq.s32.totalorder %s193, 0
    %s196 = sadd.s32 %s195, 1
    %s197 = scalar_select %p194, %s195, %s196
    %p200 = pneg %p194
    %p201 = scmp.eq.s32.totalorder %s13, 1
    %p202 = por %p200, %p201
    %p203 = scmp.ne.s32.totalorder %s195, %s198
    %p204 = scmp.eq.s32.totalorder %s13, 0
    %p205 = por %p203, %p204
    %p206 = scmp.ne.s32.totalorder %s195, %s198
    %p207 = scmp.eq.s32.totalorder %s18, 1
    %p208 = por %p206, %p207
    %p209 = scmp.ne.s32.totalorder %s198, %s199
    %p210 = scmp.eq.s32.totalorder %s18, 0
    %p211 = por %p209, %p210
    %p212 = scmp.ne.s32.totalorder %s198, %s199
    %p213 = scmp.eq.s32.totalorder %s19, 1
    %p214 = por %p212, %p213
    %p216 = scmp.ne.s32.totalorder %s199, %s215
    %p217 = scmp.eq.s32.totalorder %s19, 0
    %p218 = por %p216, %p217
    %p219 = scmp.le.s32.totalorder 1, %s13
    %p220 = scmp.lt.s32.totalorder %s13, 3
    %p221 = pnand %p219, %p220
    %p222 = pneg %p221
    // Predicated region
    $region9: #{body.12} parent=5 // pred_check
      _
    $region10: #{body.12} parent=5 // pred_check_branch
      %224 = sbr.rel (%p221) target = $region12
    $region11: #{body.12} parent=5 // pred_region
      %s225 = ssub.s32 %s13, 1
      // Predicated region
      $region13: #{body.12} parent=11 // pred_check
        %p226 = pneg %p60
      $region14: #{body.12} parent=11 // pred_check_branch
        %228 = sbr.rel (%p226) target = $region16
      $region15: #{body.12} parent=11 // pred_region
        _
      $region16: #{body.12} parent=11 // pred_fallthru
        _
      // Predicated region
      $region17: #{body.12} parent=11 // pred_check
        %p229 = pneg %p81
      $region18: #{body.12} parent=11 // pred_check_branch
        %231 = sbr.rel (%p229) target = $region20
      $region19: #{body.12} parent=11 // pred_region
        _
      $region20: #{body.12} parent=11 // pred_fallthru
        _
    $region12: #{body.12} parent=5 // pred_fallthru
      _
    %p232 = scmp.lt.s32.totalorder %s13, 2
    // Predicated region
    $region21: #{body.12} parent=5 // pred_check
      %p233 = pneg %p232
    $region22: #{body.12} parent=5 // pred_check_branch
      %235 = sbr.rel (%p233) target = $region24
    $region23: #{body.12} parent=5 // pred_region
      // Predicated region
      $region25: #{body.12} parent=23 // pred_check
        %p236 = pneg %p33
      $region26: #{body.12} parent=23 // pred_check_branch
        %238 = sbr.rel (%p236) target = $region28
      $region27: #{body.12} parent=23 // pred_region
        %p239 = scmp.lt.s32.totalorder %s13, 1
        %s240 = scalar_select %p239, %s13, 1
        %s241 = smul.addr %s240, 4
        %s242 = scalar_lea.vmem %s0, %s241
      $region28: #{body.12} parent=23 // pred_fallthru
        _
      // Predicated region
      $region29: #{body.12} parent=23 // pred_check
        %p243 = pneg %p101
      $region30: #{body.12} parent=23 // pred_check_branch
        %245 = sbr.rel (%p243) target = $region32
      $region31: #{body.12} parent=23 // pred_region
        %p246 = scmp.lt.s32.totalorder %s13, 1
        %s247 = scalar_select %p246, %s13, 1
        %s248 = smul.addr %s247, 4
        %s249 = smul.addr %s248, 8
        %s250 = scalar_lea.vmem %s3, %s249
      $region32: #{body.12} parent=23 // pred_fallthru
        _
      // Predicated region
      $region33: #{body.12} parent=23 // pred_check
        %p251 = pneg %p127
      $region34: #{body.12} parent=23 // pred_check_branch
        %253 = sbr.rel (%p251) target = $region36
      $region35: #{body.12} parent=23 // pred_region
        %p254 = scmp.lt.s32.totalorder %s13, 1
        %s255 = scalar_select %p254, %s13, 1
        %s256 = smul.addr %s255, 64
        %s257 = smul.addr %s256, 8
        %s258 = scalar_lea.vmem %s4, %s257
      $region36: #{body.12} parent=23 // pred_fallthru
        _
      // Predicated region
      $region37: #{body.12} parent=23 // pred_check
        %p259 = pneg %p153
      $region38: #{body.12} parent=23 // pred_check_branch
        %261 = sbr.rel (%p259) target = $region40
      $region39: #{body.12} parent=23 // pred_region
        %p262 = scmp.lt.s32.totalorder %s13, 1
        %s263 = scalar_select %p262, %s13, 1
        %s264 = smul.addr %s263, 4
        %s265 = smul.addr %s264, 8
        %s266 = scalar_lea.vmem %s5, %s265
      $region40: #{body.12} parent=23 // pred_fallthru
        _
      // Predicated region
      $region41: #{body.12} parent=23 // pred_check
        %p267 = pneg %p179
      $region42: #{body.12} parent=23 // pred_check_branch
        %269 = sbr.rel (%p267) target = $region44
      $region43: #{body.12} parent=23 // pred_region
        %p270 = scmp.lt.s32.totalorder %s13, 1
        %s271 = scalar_select %p270, %s13, 1
        %s272 = scalar_lea.vmem %s6, %s271
      $region44: #{body.12} parent=23 // pred_fallthru
        _
    $region24: #{body.12} parent=5 // pred_fallthru
      _
    %p273 = scmp.le.s32.totalorder 1, %s13
    %p274 = scmp.lt.s32.totalorder %s13, 3
    %p275 = pnand %p273, %p274
    %p276 = pneg %p275
    // Predicated region
    $region45: #{body.12} parent=5 // pred_check
      _
    $region46: #{body.12} parent=5 // pred_check_branch
      %278 = sbr.rel (%p275) target = $region48
    $region47: #{body.12} parent=5 // pred_region
      %s279 = ssub.s32 %s13, 1
      %p280 = scmp.lt.s32.totalorder %s18, 1
      %s281 = scalar_select %p280, %s18, 1
      %s282 = smul.addr %s281, 4
      %s283 = scalar_lea.vmem %s0, %s282
      %p284 = pneg %p39
      %p285 = pneg %p36
      %p286 = pneg %p60
      %p287 = pneg %p57
      %p288 = pneg %p81
      %p289 = pneg %p78
      %p290 = scmp.lt.s32.totalorder %s18, 1
      %s291 = scalar_select %p290, %s18, 1
      %s292 = smul.addr %s291, 4
      %s293 = smul.addr %s292, 8
      %s294 = scalar_lea.vmem %s3, %s293
      %p295 = pneg %p107
      %p296 = pneg %p104
      %p297 = scmp.lt.s32.totalorder %s18, 1
      %s298 = scalar_select %p297, %s18, 1
      %s299 = smul.addr %s298, 64
      %s300 = smul.addr %s299, 8
      %s301 = scalar_lea.vmem %s4, %s300
      %p302 = pneg %p133
      %p303 = pneg %p130
      %p304 = scmp.lt.s32.totalorder %s18, 1
      %s305 = scalar_select %p304, %s18, 1
      %s306 = smul.addr %s305, 4
      %s307 = smul.addr %s306, 8
      %s308 = scalar_lea.vmem %s5, %s307
      %p309 = pneg %p159
      %p310 = pneg %p156
      %p311 = scmp.lt.s32.totalorder %s18, 1
      %s312 = scalar_select %p311, %s18, 1
      %s313 = scalar_lea.vmem %s6, %s312
      %p314 = pneg %p185
      %p315 = pneg %p182
      %p316 = pneg %p211
      %p317 = pneg %p208
      %p318 = scmp.lt.s32.totalorder %s18, 1
      %s319 = scalar_select %p318, %s18, 1
      %s320 = smul.addr %s319, 4
      %s321 = scalar_lea.vmem %s7, %s320
      %p322 = scmp.lt.s32.totalorder %s18, 1
      %s323 = scalar_select %p322, %s18, 1
      %s324 = smul.addr %s323, 4
      %s325 = scalar_lea.vmem %s0, %s324
      %p326 = scmp.lt.s32.totalorder %s18, 1
      %s327 = scalar_select %p326, %s18, 1
      %s328 = smul.addr %s327, 4
      %s329 = smul.addr %s328, 8
      %s330 = scalar_lea.vmem %s3, %s329
      %p331 = scmp.lt.s32.totalorder %s18, 1
      %s332 = scalar_select %p331, %s18, 1
      %s333 = smul.addr %s332, 64
      %s334 = smul.addr %s333, 8
      %s335 = scalar_lea.vmem %s4, %s334
      %p336 = scmp.lt.s32.totalorder %s18, 1
      %s337 = scalar_select %p336, %s18, 1
      %s338 = smul.addr %s337, 4
      %s339 = smul.addr %s338, 8
      %s340 = scalar_lea.vmem %s5, %s339
      %p341 = scmp.lt.s32.totalorder %s18, 1
      %s342 = scalar_select %p341, %s18, 1
      %s343 = scalar_lea.vmem %s6, %s342
      %p344 = scmp.lt.s32.totalorder %s18, 1
      %s345 = scalar_select %p344, %s18, 1
      %s346 = smul.addr %s345, 4
      %s347 = scalar_lea.vmem %s7, %s346
      %v348 = vld [vmem:[%s343] sm:$0x1]
      %v349 = vunpack.c.0.s8 %v348
      %v350 = vcvt.s32.f32 %v349
      %v351 = vmul.f32 %v350, -1e+30
      %v352 = vld [vmem:[%s325] sm:$0x7]
      %v353 = vld [vmem:[%s1] sm:$0xff]
      %v354 = vld [vmem:[%s1 + $0x8] sm:$0xff]
      %v355 = vld [vmem:[%s1 + $0x10] sm:$0xff]
      %v356 = vld [vmem:[%s1 + $0x18] sm:$0xff]
      %v357 = vld [vmem:[%s1 + $0x20] sm:$0xff]
      %v358 = vld [vmem:[%s1 + $0x28] sm:$0xff]
      %v359 = vld [vmem:[%s1 + $0x30] sm:$0xff]
      %v360 = vld [vmem:[%s1 + $0x38] sm:$0xff]
      %v361 = vld [vmem:[%s1 + $0x40] sm:$0x3]
      %vm362 = vcmask 539648
      %v364 = vsel %vm362, %v352, 0
      %vm366 = vcmask 1041408
      %v368 = vsel %vm366, %v361, 0
      %370 = vmatpush.msra.mxu0 0.0
      %371 = vmatpush.msra.mxu0 0.0
      %372 = vmatpush.msra.mxu0 0.0
      %373 = vmatpush.msra.mxu0 0.0
      %374 = vmatpush.msra.mxu0 0.0
      %375 = vmatpush.msra.mxu0 0.0
      %376 = vmatpush.msra.mxu0 0.0
      %377 = vmatpush.msra.mxu0 %v368
      %378 = vmatpush.msra.mxu0 %v360
      %379 = vmatpush.msra.mxu0 %v359
      %380 = vmatpush.msra.mxu0 %v358
      %381 = vmatpush.msra.mxu0 %v357
      %382 = vmatpush.msra.mxu0 %v356
      %383 = vmatpush.msra.mxu0 %v355
      %384 = vmatpush.msra.mxu0 %v354
      %385 = vmatpush.msra.mxu0 %v353
      %386 = vmatmul.f32.gmra.mxu0 %v364
      %v387 = vpop.f32.mrf.mxu0
      %v388 = vadd.f32 0.0, %v387
      %389 = vdwg.mxu0
      %v390 = vld [vmem:[%s330] sm:$0xff]
      %vm391 = vcmask 64512
      %v393 = vsel %vm391, %v388, 0
      %395 = vmatpush.msra.mxu0 0.0
      %396 = vmatpush.msra.mxu0 0.0
      %397 = vmatpush.msra.mxu0 0.0
      %398 = vmatpush.msra.mxu0 0.0
      %399 = vmatpush.msra.mxu0 0.0
      %400 = vmatpush.msra.mxu0 0.0
      %401 = vmatpush.msra.mxu0 0.0
      %402 = vmatpush.msra.mxu0 0.0
      %403 = vmatpush.msra.mxu0 0.0
      %404 = vmatpush.msra.mxu0 0.0
      %405 = vmatpush.msra.mxu0 0.0
      %406 = vmatpush.msra.mxu0 0.0
      %407 = vmatpush.msra.mxu0 0.0
      %408 = vmatpush.msra.mxu0 0.0
      %409 = vmatpush.msra.mxu0 0.0
      %410 = vmatpush.msra.mxu0 %v390
      %411 = vmatmul.f32.gmra.mxu0 %v393
      %v412 = vpop.f32.mrf.mxu0
      %v413 = vadd.f32 0.0, %v412
      %414 = vdwg.mxu0
      %v415 = vmul.f32 %v413, 0.35355338
      %v416 = vadd.f32 %v415, %v351
      %vm417 = vcmask 1042432
      %v418 = vsel %vm417, %v416, -inf
      %419 = vmax.xlane.f32.xlu0 %v418
      %v420 = vpop.xlane.xlu0 %419
      %v421 = vsub.f32 %v416, %v420
      %v422 = vmul.f32 %v421, 1.442695
      %v423 = vpow.pop %v422
      %v424 = vsel %vm417, %v423, 0.0
      %425 = vadd.xlane.f32.xlu0 %v424
      %v426 = vpop.xlane.xlu0 %425
      %v427 = vrcp.pop %v426
      %v428 = vmul.f32 %v423, %v427
      %v429 = vld [vmem:[%s335] sm:$0xff]
      %v430 = vld [vmem:[%s335 + $0x8] sm:$0xff]
      %v431 = vld [vmem:[%s335 + $0x10] sm:$0xff]
      %v432 = vld [vmem:[%s335 + $0x18] sm:$0xff]
      %v433 = vld [vmem:[%s335 + $0x20] sm:$0xff]
      %v434 = vld [vmem:[%s335 + $0x28] sm:$0xff]
      %v435 = vld [vmem:[%s335 + $0x30] sm:$0xff]
      %v436 = vld [vmem:[%s335 + $0x38] sm:$0xff]
      %v437 = vld [vmem:[%s335 + $0x40] sm:$0xff]
      %v438 = vld [vmem:[%s335 + $0x48] sm:$0xff]
      %v439 = vld [vmem:[%s335 + $0x50] sm:$0xff]
      %v440 = vld [vmem:[%s335 + $0x58] sm:$0xff]
      %v441 = vld [vmem:[%s335 + $0x60] sm:$0xff]
      %v442 = vld [vmem:[%s335 + $0x68] sm:$0xff]
      %v443 = vld [vmem:[%s335 + $0x70] sm:$0xff]
      %v444 = vld [vmem:[%s335 + $0x78] sm:$0xff]
      %445 = vmatpush.msra.mxu0 %v444
      %446 = vmatpush.msra.mxu0 %v443
      %447 = vmatpush.msra.mxu0 %v442
      %448 = vmatpush.msra.mxu0 %v441
      %449 = vmatpush.msra.mxu0 %v440
      %450 = vmatpush.msra.mxu0 %v439
      %451 = vmatpush.msra.mxu0 %v438
      %452 = vmatpush.msra.mxu0 %v437
      %453 = vmatpush.msra.mxu0 %v436
      %454 = vmatpush.msra.mxu0 %v435
      %455 = vmatpush.msra.mxu0 %v434
      %456 = vmatpush.msra.mxu0 %v433
      %457 = vmatpush.msra.mxu0 %v432
      %458 = vmatpush.msra.mxu0 %v431
      %459 = vmatpush.msra.mxu0 %v430
      %460 = vmatpush.msra.mxu0 %v429
      %461 = vmatmul.f32.gmra.mxu0 %v428
      %v462 = vpop.f32.mrf.mxu0
      %v463 = vadd.f32 0.0, %v462
      %464 = vdwg.mxu0
      %vm465 = vcmask 59392
      %466 = vst.msk [vmem:[#allocation2] sm:$0x7] %vm465, %v463
      %s467 = scalar_lea.vmem %s330, 8
      %v468 = vld [vmem:[%s467] sm:$0xff]
      %469 = vrot.lane.b32.xlu0 %v388, 120
      %v470 = vpop.permute.xlu0 %469
      %v471 = vsel %vm391, %v470, 0
      %473 = vmatpush.msra.mxu0 0.0
      %474 = vmatpush.msra.mxu0 0.0
      %475 = vmatpush.msra.mxu0 0.0
      %476 = vmatpush.msra.mxu0 0.0
      %477 = vmatpush.msra.mxu0 0.0
      %478 = vmatpush.msra.mxu0 0.0
      %479 = vmatpush.msra.mxu0 0.0
      %480 = vmatpush.msra.mxu0 0.0
      %481 = vmatpush.msra.mxu0 0.0
      %482 = vmatpush.msra.mxu0 0.0
      %483 = vmatpush.msra.mxu0 0.0
      %484 = vmatpush.msra.mxu0 0.0
      %485 = vmatpush.msra.mxu0 0.0
      %486 = vmatpush.msra.mxu0 0.0
      %487 = vmatpush.msra.mxu0 0.0
      %488 = vmatpush.msra.mxu0 %v468
      %489 = vmatmul.f32.gmra.mxu0 %v471
      %v490 = vpop.f32.mrf.mxu0
      %v491 = vadd.f32 0.0, %v490
      %492 = vdwg.mxu0
      %v493 = vmul.f32 %v491, 0.35355338
      %v494 = vadd.f32 %v493, %v351
      %v495 = vsel %vm417, %v494, -inf
      %496 = vmax.xlane.f32.xlu0 %v495
      %v497 = vpop.xlane.xlu0 %496
      %v498 = vsub.f32 %v494, %v497
      %v499 = vmul.f32 %v498, 1.442695
      %v500 = vpow.pop %v499
      %v501 = vsel %vm417, %v500, 0.0
      %502 = vadd.xlane.f32.xlu0 %v501
      %v503 = vpop.xlane.xlu0 %502
      %v504 = vrcp.pop %v503
      %v505 = vmul.f32 %v500, %v504
      %s506 = scalar_lea.vmem %s335, 128
      %v507 = vld [vmem:[%s506] sm:$0xff]
      %v508 = vld [vmem:[%s506 + $0x8] sm:$0xff]
      %v509 = vld [vmem:[%s506 + $0x10] sm:$0xff]
      %v510 = vld [vmem:[%s506 + $0x18] sm:$0xff]
      %v511 = vld [vmem:[%s506 + $0x20] sm:$0xff]
      %v512 = vld [vmem:[%s506 + $0x28] sm:$0xff]
      %v513 = vld [vmem:[%s506 + $0x30] sm:$0xff]
      %v514 = vld [vmem:[%s506 + $0x38] sm:$0xff]
      %v515 = vld [vmem:[%s506 + $0x40] sm:$0xff]
      %v516 = vld [vmem:[%s506 + $0x48] sm:$0xff]
      %v517 = vld [vmem:[%s506 + $0x50] sm:$0xff]
      %v518 = vld [vmem:[%s506 + $0x58] sm:$0xff]
      %v519 = vld [vmem:[%s506 + $0x60] sm:$0xff]
      %v520 = vld [vmem:[%s506 + $0x68] sm:$0xff]
      %v521 = vld [vmem:[%s506 + $0x70] sm:$0xff]
      %v522 = vld [vmem:[%s506 + $0x78] sm:$0xff]
      %523 = vmatpush.msra.mxu0 %v522
      %524 = vmatpush.msra.mxu0 %v521
      %525 = vmatpush.msra.mxu0 %v520
      %526 = vmatpush.msra.mxu0 %v519
      %527 = vmatpush.msra.mxu0 %v518
      %528 = vmatpush.msra.mxu0 %v517
      %529 = vmatpush.msra.mxu0 %v516
      %530 = vmatpush.msra.mxu0 %v515
      %531 = vmatpush.msra.mxu0 %v514
      %532 = vmatpush.msra.mxu0 %v513
      %533 = vmatpush.msra.mxu0 %v512
      %534 = vmatpush.msra.mxu0 %v511
      %535 = vmatpush.msra.mxu0 %v510
      %536 = vmatpush.msra.mxu0 %v509
      %537 = vmatpush.msra.mxu0 %v508
      %538 = vmatpush.msra.mxu0 %v507
      %539 = vmatmul.f32.gmra.mxu0 %v505
      %v540 = vpop.f32.mrf.mxu0
      %v541 = vadd.f32 0.0, %v540
      %542 = vdwg.mxu0
      %544 = vrot.lane.b32.xlu0 %v541, 8
      %v545 = vpop.permute.xlu0 %544
      %vm547 = vcmask 124992
      %548 = vst.msk [vmem:[#allocation2] sm:$0x7] %vm547, %v545
      %s549 = scalar_lea.vmem %s330, 16
      %v550 = vld [vmem:[%s549] sm:$0xff]
      %551 = vrot.lane.b32.xlu0 %v388, 112
      %v552 = vpop.permute.xlu0 %551
      %v553 = vsel %vm391, %v552, 0
      %555 = vmatpush.msra.mxu0 0.0
      %556 = vmatpush.msra.mxu0 0.0
      %557 = vmatpush.msra.mxu0 0.0
      %558 = vmatpush.msra.mxu0 0.0
      %559 = vmatpush.msra.mxu0 0.0
      %560 = vmatpush.msra.mxu0 0.0
      %561 = vmatpush.msra.mxu0 0.0
      %562 = vmatpush.msra.mxu0 0.0
      %563 = vmatpush.msra.mxu0 0.0
      %564 = vmatpush.msra.mxu0 0.0
      %565 = vmatpush.msra.mxu0 0.0
      %566 = vmatpush.msra.mxu0 0.0
      %567 = vmatpush.msra.mxu0 0.0
      %568 = vmatpush.msra.mxu0 0.0
      %569 = vmatpush.msra.mxu0 0.0
      %570 = vmatpush.msra.mxu0 %v550
      %571 = vmatmul.f32.gmra.mxu0 %v553
      %v572 = vpop.f32.mrf.mxu0
      %v573 = vadd.f32 0.0, %v572
      %574 = vdwg.mxu0
      %v575 = vmul.f32 %v573, 0.35355338
      %v576 = vadd.f32 %v575, %v351
      %v577 = vsel %vm417, %v576, -inf
      %578 = vmax.xlane.f32.xlu0 %v577
      %v579 = vpop.xlane.xlu0 %578
      %v580 = vsub.f32 %v576, %v579
      %v581 = vmul.f32 %v580, 1.442695
      %v582 = vpow.pop %v581
      %v583 = vsel %vm417, %v582, 0.0
      %584 = vadd.xlane.f32.xlu0 %v583
      %v585 = vpop.xlane.xlu0 %584
      %v586 = vrcp.pop %v585
      %v587 = vmul.f32 %v582, %v586
      %s588 = scalar_lea.vmem %s335, 256
      %v589 = vld [vmem:[%s588] sm:$0xff]
      %v590 = vld [vmem:[%s588 + $0x8] sm:$0xff]
      %v591 = vld [vmem:[%s588 + $0x10] sm:$0xff]
      %v592 = vld [vmem:[%s588 + $0x18] sm:$0xff]
      %v593 = vld [vmem:[%s588 + $0x20] sm:$0xff]
      %v594 = vld [vmem:[%s588 + $0x28] sm:$0xff]
      %v595 = vld [vmem:[%s588 + $0x30] sm:$0xff]
      %v596 = vld [vmem:[%s588 + $0x38] sm:$0xff]
      %v597 = vld [vmem:[%s588 + $0x40] sm:$0xff]
      %v598 = vld [vmem:[%s588 + $0x48] sm:$0xff]
      %v599 = vld [vmem:[%s588 + $0x50] sm:$0xff]
      %v600 = vld [vmem:[%s588 + $0x58] sm:$0xff]
      %v601 = vld [vmem:[%s588 + $0x60] sm:$0xff]
      %v602 = vld [vmem:[%s588 + $0x68] sm:$0xff]
      %v603 = vld [vmem:[%s588 + $0x70] sm:$0xff]
      %v604 = vld [vmem:[%s588 + $0x78] sm:$0xff]
      %605 = vmatpush.msra.mxu0 %v604
      %606 = vmatpush.msra.mxu0 %v603
      %607 = vmatpush.msra.mxu0 %v602
      %608 = vmatpush.msra.mxu0 %v601
      %609 = vmatpush.msra.mxu0 %v600
      %610 = vmatpush.msra.mxu0 %v599
      %611 = vmatpush.msra.mxu0 %v598
      %612 = vmatpush.msra.mxu0 %v597
      %613 = vmatpush.msra.mxu0 %v596
      %614 = vmatpush.msra.mxu0 %v595
      %615 = vmatpush.msra.mxu0 %v594
      %616 = vmatpush.msra.mxu0 %v593
      %617 = vmatpush.msra.mxu0 %v592
      %618 = vmatpush.msra.mxu0 %v591
      %619 = vmatpush.msra.mxu0 %v590
      %620 = vmatpush.msra.mxu0 %v589
      %621 = vmatmul.f32.gmra.mxu0 %v587
      %v622 = vpop.f32.mrf.mxu0
      %v623 = vadd.f32 0.0, %v622
      %624 = vdwg.mxu0
      %626 = vrot.lane.b32.xlu0 %v623, 16
      %v627 = vpop.permute.xlu0 %626
      %vm629 = vcmask 190592
      %630 = vst.msk [vmem:[#allocation2] sm:$0x7] %vm629, %v627
      %s631 = scalar_lea.vmem %s330, 24
      %v632 = vld [vmem:[%s631] sm:$0xff]
      %633 = vrot.lane.b32.xlu0 %v388, 104
      %v634 = vpop.permute.xlu0 %633
      %v635 = vsel %vm391, %v634, 0
      %637 = vmatpush.msra.mxu0 0.0
      %638 = vmatpush.msra.mxu0 0.0
      %639 = vmatpush.msra.mxu0 0.0
      %640 = vmatpush.msra.mxu0 0.0
      %641 = vmatpush.msra.mxu0 0.0
      %642 = vmatpush.msra.mxu0 0.0
      %643 = vmatpush.msra.mxu0 0.0
      %644 = vmatpush.msra.mxu0 0.0
      %645 = vmatpush.msra.mxu0 0.0
      %646 = vmatpush.msra.mxu0 0.0
      %647 = vmatpush.msra.mxu0 0.0
      %648 = vmatpush.msra.mxu0 0.0
      %649 = vmatpush.msra.mxu0 0.0
      %650 = vmatpush.msra.mxu0 0.0
      %651 = vmatpush.msra.mxu0 0.0
      %652 = vmatpush.msra.mxu0 %v632
      %653 = vmatmul.f32.gmra.mxu0 %v635
      %v654 = vpop.f32.mrf.mxu0
      %v655 = vadd.f32 0.0, %v654
      %656 = vdwg.mxu0
      %v657 = vmul.f32 %v655, 0.35355338
      %v658 = vadd.f32 %v657, %v351
      %v659 = vsel %vm417, %v658, -inf
      %660 = vmax.xlane.f32.xlu0 %v659
      %v661 = vpop.xlane.xlu0 %660
      %v662 = vsub.f32 %v658, %v661
      %v663 = vmul.f32 %v662, 1.442695
      %v664 = vpow.pop %v663
      %v665 = vsel %vm417, %v664, 0.0
      %666 = vadd.xlane.f32.xlu0 %v665
      %v667 = vpop.xlane.xlu0 %666
      %v668 = vrcp.pop %v667
      %v669 = vmul.f32 %v664, %v668
      %s670 = scalar_lea.vmem %s335, 384
      %v671 = vld [vmem:[%s670] sm:$0xff]
      %v672 = vld [vmem:[%s670 + $0x8] sm:$0xff]
      %v673 = vld [vmem:[%s670 + $0x10] sm:$0xff]
      %v674 = vld [vmem:[%s670 + $0x18] sm:$0xff]
      %v675 = vld [vmem:[%s670 + $0x20] sm:$0xff]
      %v676 = vld [vmem:[%s670 + $0x28] sm:$0xff]
      %v677 = vld [vmem:[%s670 + $0x30] sm:$0xff]
      %v678 = vld [vmem:[%s670 + $0x38] sm:$0xff]
      %v679 = vld [vmem:[%s670 + $0x40] sm:$0xff]
      %v680 = vld [vmem:[%s670 + $0x48] sm:$0xff]
      %v681 = vld [vmem:[%s670 + $0x50] sm:$0xff]
      %v682 = vld [vmem:[%s670 + $0x58] sm:$0xff]
      %v683 = vld [vmem:[%s670 + $0x60] sm:$0xff]
      %v684 = vld [vmem:[%s670 + $0x68] sm:$0xff]
      %v685 = vld [vmem:[%s670 + $0x70] sm:$0xff]
      %v686 = vld [vmem:[%s670 + $0x78] sm:$0xff]
      %687 = vmatpush.msra.mxu0 %v686
      %688 = vmatpush.msra.mxu0 %v685
      %689 = vmatpush.msra.mxu0 %v684
      %690 = vmatpush.msra.mxu0 %v683
      %691 = vmatpush.msra.mxu0 %v682
      %692 = vmatpush.msra.mxu0 %v681
      %693 = vmatpush.msra.mxu0 %v680
      %694 = vmatpush.msra.mxu0 %v679
      %695 = vmatpush.msra.mxu0 %v678
      %696 = vmatpush.msra.mxu0 %v677
      %697 = vmatpush.msra.mxu0 %v676
      %698 = vmatpush.msra.mxu0 %v675
      %699 = vmatpush.msra.mxu0 %v674
      %700 = vmatpush.msra.mxu0 %v673
      %701 = vmatpush.msra.mxu0 %v672
      %702 = vmatpush.msra.mxu0 %v671
      %703 = vmatmul.f32.gmra.mxu0 %v669
      %v704 = vpop.f32.mrf.mxu0
      %v705 = vadd.f32 0.0, %v704
      %706 = vdwg.mxu0
      %708 = vrot.lane.b32.xlu0 %v705, 24
      %v709 = vpop.permute.xlu0 %708
      %vm711 = vcmask 256192
      %712 = vst.msk [vmem:[#allocation2] sm:$0x7] %vm711, %v709
      %v713 = vld [vmem:[#allocation2] sm:$0x7]
      %v714 = vld [vmem:[%s2] sm:$0xff]
      %v715 = vld [vmem:[%s2 + $0x8] sm:$0xff]
      %v716 = vld [vmem:[%s2 + $0x10] sm:$0xff]
      %v717 = vld [vmem:[%s2 + $0x18] sm:$0xff]
      %vm718 = vcmask 261120
      %v720 = vsel %vm718, %v713, 0
      %722 = vmatpush.msra.mxu0 0.0
      %723 = vmatpush.msra.mxu0 0.0
      %724 = vmatpush.msra.mxu0 0.0
      %725 = vmatpush.msra.mxu0 0.0
      %726 = vmatpush.msra.mxu0 0.0
      %727 = vmatpush.msra.mxu0 0.0
      %728 = vmatpush.msra.mxu0 0.0
      %729 = vmatpush.msra.mxu0 0.0
      %730 = vmatpush.msra.mxu0 0.0
      %731 = vmatpush.msra.mxu0 0.0
      %732 = vmatpush.msra.mxu0 0.0
      %733 = vmatpush.msra.mxu0 0.0
      %734 = vmatpush.msra.mxu0 %v717
      %735 = vmatpush.msra.mxu0 %v716
      %736 = vmatpush.msra.mxu0 %v715
      %737 = vmatpush.msra.mxu0 %v714
      %738 = vmatmul.f32.gmra.mxu0 %v720
      %v739 = vpop.f32.mrf.mxu0
      %v740 = vadd.f32 0.0, %v739
      %741 = vdwg.mxu0
      %v742 = vld [vmem:[%s340] sm:$0xff]
      %v743 = vld [vmem:[%s340 + $0x8] sm:$0xff]
      %v744 = vld [vmem:[%s340 + $0x10] sm:$0xff]
      %v745 = vld [vmem:[%s340 + $0x18] sm:$0xff]
      %v747 = vsel %vm718, %v740, 0
      %749 = vmatpush.msra.mxu0 0.0
      %750 = vmatpush.msra.mxu0 0.0
      %751 = vmatpush.msra.mxu0 0.0
      %752 = vmatpush.msra.mxu0 0.0
      %753 = vmatpush.msra.mxu0 0.0
      %754 = vmatpush.msra.mxu0 0.0
      %755 = vmatpush.msra.mxu0 0.0
      %756 = vmatpush.msra.mxu0 0.0
      %757 = vmatpush.msra.mxu0 0.0
      %758 = vmatpush.msra.mxu0 0.0
      %759 = vmatpush.msra.mxu0 0.0
      %760 = vmatpush.msra.mxu0 0.0
      %761 = vmatpush.msra.mxu0 %v745
      %762 = vmatpush.msra.mxu0 %v744
      %763 = vmatpush.msra.mxu0 %v743
      %764 = vmatpush.msra.mxu0 %v742
      %765 = vmatmul.f32.gmra.mxu0 %v747
      %v766 = vpop.f32.mrf.mxu0
      %v767 = vadd.f32 0.0, %v766
      %768 = vdwg.mxu0
      %v769 = vmul.f32 %v767, 0.17677669
      %v770 = vtanh.pop %v769
      %v771 = vmul.f32 %v770, 10.0
      %vm772 = vcmp.gt.f32.partialorder %v350, 0.5
      %v773 = vsel %vm772, -1e+30, %v771
      %774 = vst [vmem:[%s347] sm:$0x7] %v773
      %p775 = scmp.lt.s32.totalorder %s18, 1
      %s776 = scalar_select %p775, %s18, 1
      %s777 = smul.addr %s776, 4
      %s778 = scalar_lea.vmem %s7, %s777
      // Predicated region
      $region49: #{body.12} parent=47 // pred_check
        %p779 = pneg %p208
      $region50: #{body.12} parent=47 // pred_check_branch
        %781 = sbr.rel (%p779) target = $region52
      $region51: #{body.12} parent=47 // pred_region
        _
      $region52: #{body.12} parent=47 // pred_fallthru
        _
    $region48: #{body.12} parent=5 // pred_fallthru
      _
    %p782 = scmp.le.s32.totalorder 2, %s13
    // Predicated region
    $region53: #{body.12} parent=5 // pred_check
      %p783 = pneg %p782
    $region54: #{body.12} parent=5 // pred_check_branch
      %785 = sbr.rel (%p783) target = $region56
    $region55: #{body.12} parent=5 // pred_region
      %s786 = ssub.s32 %s13, 2
      // Predicated region
      $region57: #{body.12} parent=55 // pred_check
        %p787 = pneg %p214
      $region58: #{body.12} parent=55 // pred_check_branch
        %789 = sbr.rel (%p787) target = $region60
      $region59: #{body.12} parent=55 // pred_region
        %p790 = scmp.lt.s32.totalorder %s19, 1
        %s791 = scalar_select %p790, %s19, 1
        %s792 = smul.addr %s791, 4
        %s793 = scalar_lea.vmem %s7, %s792
      $region60: #{body.12} parent=55 // pred_fallthru
        _
    $region56: #{body.12} parent=5 // pred_fallthru
      _
  $region6: #{body.12} parent=0 // loop_footer
    %s17 = sadd.s32 1, %s13
  $region7: #{body.12} parent=0 // loop_footer_branch
    %12 = sbr.rel target = $region3
  $region8: #{body.12} parent=0 // loop_exit
    _

</llo_original>
